<compile_context>
chip_gen: v6e
topology: v6e:2x2x1
jax: 0.10.0
libtpu: 0.0.40
codegen_flags: <defaults>
</compile_context>

<pallas_src>
import jax
import jax.numpy as jnp
from jax.experimental import pallas as pl
from jax.experimental.pallas import tpu as pltpu


def _sigmoid(z):
    return 1.0 / (1.0 + jnp.exp(-z))


def _scse_kernel(x_ref,    # VMEM (1, C, HW)  one sample, spatial flattened
                 w1_ref,   # VMEM (Cr, C)     cSE reduce 1x1-conv weight
                 b1_ref,   # VMEM (Cr, 1)
                 w2_ref,   # VMEM (C, Cr)     cSE expand 1x1-conv weight
                 b2_ref,   # VMEM (C, 1)
                 ws_ref,   # VMEM (1, C)      sSE 1x1-conv (C -> 1) weight
                 bs_ref,   # VMEM (1, 1)
                 o_ref):   # VMEM (1, C, HW)
    x = x_ref[0]                                            # (C, HW) f32
    hw = x.shape[1]

    # ---- channel squeeze-excitation (cSE) gate --------------------------
    pooled = jnp.sum(x, axis=1, keepdims=True) * (1.0 / hw)            # (C, 1)
    hidden = jnp.dot(w1_ref[...], pooled,
                     preferred_element_type=jnp.float32,
                     precision=jax.lax.Precision.HIGHEST) + b1_ref[...]
    hidden = jnp.maximum(hidden, 0.0)                                  # (Cr, 1)
    cgate = jnp.dot(w2_ref[...], hidden,
                    preferred_element_type=jnp.float32,
                    precision=jax.lax.Precision.HIGHEST) + b2_ref[...]
    cgate = _sigmoid(cgate)                                            # (C, 1)

    # ---- spatial squeeze-excitation (sSE) gate: 1x1 conv C->1 + sigmoid -
    sgate = jnp.dot(ws_ref[...], x,
                    preferred_element_type=jnp.float32,
                    precision=jax.lax.Precision.HIGHEST) + bs_ref[...]
    sgate = _sigmoid(sgate)                                            # (1, HW)

    # ---- fused blend: cSE(x) + x*sSE(x) = x * (cgate + sgate) -----------
    o_ref[0] = (x * (cgate + sgate)).astype(o_ref.dtype)


def scse_forward_nchw(x_nchw, w1, b1, w2, b2, ws, bs):
    """SCSE forward.

    x_nchw : (B, C, H, W) float32
    w1, b1 : (Cr, C), (Cr,)  -- cSE reduce 1x1 conv (PyTorch weight[..., 0, 0])
    w2, b2 : (C, Cr), (C,)   -- cSE expand 1x1 conv
    ws, bs : (1, C),  (1,)   -- sSE 1x1 conv (C -> 1)
    """
    B, C, H, W = x_nchw.shape
    HW = H * W
    Cr = w1.shape[0]

    # Free reshapes of contiguous dims only: no pad, no transpose, no extra
    # full-tensor HBM passes outside the kernel.
    x2 = x_nchw.reshape(B, C, HW)
    b1c = b1.reshape(Cr, 1)
    b2c = b2.reshape(C, 1)
    bsc = bs.reshape(1, 1)

    # TODO(synk): for very large per-sample tiles (C*H*W*4B approaching the
    # VMEM budget, esp. v7x's 64 MiB) add an H*W grid axis with a two-pass
    # pool/apply scheme; unnecessary at these shapes (32 KiB per block).
    grid_spec = pltpu.PrefetchScalarGridSpec(
        num_scalar_prefetch=0,
        grid=(B,),
        in_specs=[
            pl.BlockSpec((1, C, HW), lambda b: (b, 0, 0)),   # x (one sample)
            pl.BlockSpec((Cr, C),    lambda b: (0, 0)),      # w1 (resident)
            pl.BlockSpec((Cr, 1),    lambda b: (0, 0)),      # b1
            pl.BlockSpec((C, Cr),    lambda b: (0, 0)),      # w2
            pl.BlockSpec((C, 1),     lambda b: (0, 0)),      # b2
            pl.BlockSpec((1, C),     lambda b: (0, 0)),      # ws
            pl.BlockSpec((1, 1),     lambda b: (0, 0)),      # bs
        ],
        out_specs=pl.BlockSpec((1, C, HW), lambda b: (b, 0, 0)),
    )

    out2 = pl.pallas_call(
        _scse_kernel,
        out_shape=jax.ShapeDtypeStruct((B, C, HW), x_nchw.dtype),
        grid_spec=grid_spec,
        compiler_params=pltpu.CompilerParams(
            dimension_semantics=("parallel",)),
    )(x2, w1, b1c, w2, b2c, ws, bsc)

    return out2.reshape(B, C, H, W)


if __name__ == "__main__":
    # Small shapes consistent with SCSEModule(in_channels=32, reduction=16).
    B, C, H, W = 2, 32, 16, 16
    reduction = 16
    Cr = C // reduction  # = 2

    key = jax.random.PRNGKey(0)
    k_x, k_w1, k_b1, k_w2, k_b2, k_ws, k_bs = jax.random.split(key, 7)

    x = jax.random.normal(k_x, (B, C, H, W), dtype=jnp.float32)

    # PyTorch-default-like 1x1-conv init: uniform(-1/sqrt(fan_in), 1/sqrt(fan_in)).
    def uinit(k, shape, fan_in):
        bound = (1.0 / fan_in) ** 0.5
        return jax.random.uniform(k, shape, jnp.float32, -bound, bound)

    w1 = uinit(k_w1, (Cr, C), C)     # cSE: Conv2d(C, Cr, 1) weight[..., 0, 0]
    b1 = uinit(k_b1, (Cr,), C)
    w2 = uinit(k_w2, (C, Cr), Cr)    # cSE: Conv2d(Cr, C, 1) weight[..., 0, 0]
    b2 = uinit(k_b2, (C,), Cr)
    ws = uinit(k_ws, (1, C), C)      # sSE: Conv2d(C, 1, 1) weight[..., 0, 0]
    bs = uinit(k_bs, (1,), C)

    out = scse_forward_nchw(x, w1, b1, w2, b2, ws, bs)
    jax.block_until_ready(out)

    # Pure-JAX reference (matches PyTorch SCSEModule.forward).
    hp = jax.lax.Precision.HIGHEST
    pooled = jnp.mean(x, axis=(2, 3))                                    # (B, C)
    hidden = jnp.maximum(jnp.dot(pooled, w1.T, precision=hp) + b1, 0.0)  # (B, Cr)
    cgate = _sigmoid(jnp.dot(hidden, w2.T, precision=hp) + b2)           # (B, C)
    cse = x * cgate[:, :, None, None]
    sgate = _sigmoid(jnp.einsum('bchw,oc->bohw', x, ws, precision=hp)
                     + bs[None, :, None, None])                          # (B,1,H,W)
    ref = cse + x * sgate

    assert jnp.allclose(out, ref, atol=1e-5, rtol=1e-5)
    print("KERNEL_OK")
</pallas_src>

<mosaic_0001>
module attributes {stable_mosaic.version = 11 : i64} {
  func.func @_scse_kernel(%arg0: i32, %arg1: memref<1x32x256xf32, #tpu.memory_space<vmem>>, %arg2: memref<2x32xf32, #tpu.memory_space<vmem>>, %arg3: memref<2x1xf32, #tpu.memory_space<vmem>>, %arg4: memref<32x2xf32, #tpu.memory_space<vmem>>, %arg5: memref<32x1xf32, #tpu.memory_space<vmem>>, %arg6: memref<1x32xf32, #tpu.memory_space<vmem>>, %arg7: memref<1x1xf32, #tpu.memory_space<vmem>>, %arg8: memref<1x32x256xf32, #tpu.memory_space<vmem>>) attributes {dimension_semantics = [#tpu.dimension_semantics<parallel>], iteration_bounds = array<i64: 2>, scalar_prefetch = 0 : i64, scratch_operands = 0 : i64, tpu.core_type = #tpu.core_type<tc>, window_params = [{transform_indices = @transform_0, window_bounds = array<i64: 1, 32, 256>}, {pipeline_mode = #tpu.pipeline_mode<synchronous>, transform_indices = @transform_1, window_bounds = array<i64: 2, 32>}, {pipeline_mode = #tpu.pipeline_mode<synchronous>, transform_indices = @transform_2, window_bounds = array<i64: 2, 1>}, {pipeline_mode = #tpu.pipeline_mode<synchronous>, transform_indices = @transform_3, window_bounds = array<i64: 32, 2>}, {pipeline_mode = #tpu.pipeline_mode<synchronous>, transform_indices = @transform_4, window_bounds = array<i64: 32, 1>}, {pipeline_mode = #tpu.pipeline_mode<synchronous>, transform_indices = @transform_5, window_bounds = array<i64: 1, 32>}, {pipeline_mode = #tpu.pipeline_mode<synchronous>, transform_indices = @transform_6, window_bounds = array<i64: 1, 1>}, {transform_indices = @transform_7, window_bounds = array<i64: 1, 32, 256>}]} {
    %c0 = arith.constant 0 : index
    %c0_0 = arith.constant 0 : index
    %c0_1 = arith.constant 0 : index
    %0 = vector.load %arg1[%c0, %c0_0, %c0_1] : memref<1x32x256xf32, #tpu.memory_space<vmem>>, vector<1x32x256xf32>
    %1 = vector.shape_cast %0 : vector<1x32x256xf32> to vector<32x256xf32>
    %cst = arith.constant dense<0.000000e+00> : vector<32xf32>
    %2 = vector.multi_reduction <add>, %1, %cst [1] : vector<32x256xf32> to vector<32xf32>
    %3 = vector.shape_cast %2 : vector<32xf32> to vector<32x1xf32>
    %cst_2 = arith.constant 3.906250e-03 : f32
    %4 = vector.broadcast %cst_2 : f32 to vector<32x1xf32>
    %5 = arith.mulf %3, %4 : vector<32x1xf32>
    %c0_3 = arith.constant 0 : index
    %c0_4 = arith.constant 0 : index
    %6 = vector.load %arg2[%c0_3, %c0_4] : memref<2x32xf32, #tpu.memory_space<vmem>>, vector<2x32xf32>
    %cst_5 = arith.constant dense<0.000000e+00> : vector<2x1xf32>
    %7 = tpu.matmul %6, %5, %cst_5 {dimension_numbers = #tpu.dot_dimension_numbers<[1], [0], [0], [1], [0, 0, 1, 1], [], []>, precision = #tpu.contract_precision<fp32>} : vector<2x32xf32>, vector<32x1xf32>, vector<2x1xf32> -> vector<2x1xf32>
    %c0_6 = arith.constant 0 : index
    %c0_7 = arith.constant 0 : index
    %8 = vector.load %arg3[%c0_6, %c0_7] : memref<2x1xf32, #tpu.memory_space<vmem>>, vector<2x1xf32>
    %9 = arith.addf %7, %8 : vector<2x1xf32>
    %cst_8 = arith.constant 0.000000e+00 : f32
    %10 = vector.broadcast %cst_8 : f32 to vector<2x1xf32>
    %11 = arith.maximumf %9, %10 : vector<2x1xf32>
    %c0_9 = arith.constant 0 : index
    %c0_10 = arith.constant 0 : index
    %12 = vector.load %arg4[%c0_9, %c0_10] : memref<32x2xf32, #tpu.memory_space<vmem>>, vector<32x2xf32>
    %cst_11 = arith.constant dense<0.000000e+00> : vector<32x1xf32>
    %13 = tpu.matmul %12, %11, %cst_11 {dimension_numbers = #tpu.dot_dimension_numbers<[1], [0], [0], [1], [0, 0, 1, 1], [], []>, precision = #tpu.contract_precision<fp32>} : vector<32x2xf32>, vector<2x1xf32>, vector<32x1xf32> -> vector<32x1xf32>
    %c0_12 = arith.constant 0 : index
    %c0_13 = arith.constant 0 : index
    %14 = vector.load %arg5[%c0_12, %c0_13] : memref<32x1xf32, #tpu.memory_space<vmem>>, vector<32x1xf32>
    %15 = arith.addf %13, %14 : vector<32x1xf32>
    %cst_14 = arith.constant 0.000000e+00 : f32
    %16 = vector.broadcast %cst_14 : f32 to vector<32x1xf32>
    %17 = arith.subf %16, %15 : vector<32x1xf32>
    %18 = math.exp %17 : vector<32x1xf32>
    %cst_15 = arith.constant 1.000000e+00 : f32
    %19 = vector.broadcast %cst_15 : f32 to vector<32x1xf32>
    %20 = arith.addf %19, %18 : vector<32x1xf32>
    %cst_16 = arith.constant 1.000000e+00 : f32
    %21 = vector.broadcast %cst_16 : f32 to vector<32x1xf32>
    %22 = arith.divf %21, %20 : vector<32x1xf32>
    %c0_17 = arith.constant 0 : index
    %c0_18 = arith.constant 0 : index
    %23 = vector.load %arg6[%c0_17, %c0_18] : memref<1x32xf32, #tpu.memory_space<vmem>>, vector<1x32xf32>
    %cst_19 = arith.constant dense<0.000000e+00> : vector<1x256xf32>
    %24 = tpu.matmul %23, %1, %cst_19 {dimension_numbers = #tpu.dot_dimension_numbers<[1], [0], [0], [1], [0, 0, 1, 1], [], []>, precision = #tpu.contract_precision<fp32>} : vector<1x32xf32>, vector<32x256xf32>, vector<1x256xf32> -> vector<1x256xf32>
    %c0_20 = arith.constant 0 : index
    %c0_21 = arith.constant 0 : index
    %25 = vector.load %arg7[%c0_20, %c0_21] : memref<1x1xf32, #tpu.memory_space<vmem>>, vector<1x1xf32>
    %26 = vector.broadcast %25 : vector<1x1xf32> to vector<1x256xf32>
    %27 = arith.addf %24, %26 : vector<1x256xf32>
    %cst_22 = arith.constant 0.000000e+00 : f32
    %28 = vector.broadcast %cst_22 : f32 to vector<1x256xf32>
    %29 = arith.subf %28, %27 : vector<1x256xf32>
    %30 = math.exp %29 : vector<1x256xf32>
    %cst_23 = arith.constant 1.000000e+00 : f32
    %31 = vector.broadcast %cst_23 : f32 to vector<1x256xf32>
    %32 = arith.addf %31, %30 : vector<1x256xf32>
    %cst_24 = arith.constant 1.000000e+00 : f32
    %33 = vector.broadcast %cst_24 : f32 to vector<1x256xf32>
    %34 = arith.divf %33, %32 : vector<1x256xf32>
    %35 = vector.broadcast %22 : vector<32x1xf32> to vector<32x256xf32>
    %36 = vector.broadcast %34 : vector<1x256xf32> to vector<32x256xf32>
    %37 = arith.addf %35, %36 : vector<32x256xf32>
    %38 = arith.mulf %1, %37 : vector<32x256xf32>
    %c0_25 = arith.constant 0 : index
    %c0_26 = arith.constant 0 : index
    %c0_27 = arith.constant 0 : index
    %39 = vector.load %arg8[%c0_25, %c0_26, %c0_27] : memref<1x32x256xf32, #tpu.memory_space<vmem>>, vector<1x32x256xf32>
    %40 = vector.shape_cast %39 : vector<1x32x256xf32> to vector<32x256xf32>
    %41 = vector.shape_cast %38 : vector<32x256xf32> to vector<1x32x256xf32>
    tpu.vector_store %arg8[%c0_25, %c0_26, %c0_27], %41 {strides = array<i32>} : memref<1x32x256xf32, #tpu.memory_space<vmem>>, vector<1x32x256xf32>,
    return
  }
  func.func @transform_0(%arg0: i32) -> (i32, i32, i32) {
    %c0_i32 = arith.constant 0 : i32
    %c0_i32_0 = arith.constant 0 : i32
    %c0_i32_1 = arith.constant 0 : i32
    return %arg0, %c0_i32, %c0_i32_0 : i32, i32, i32
  }
  func.func @transform_1(%arg0: i32) -> (i32, i32) {
    %c0_i32 = arith.constant 0 : i32
    %c0_i32_0 = arith.constant 0 : i32
    %c0_i32_1 = arith.constant 0 : i32
    return %c0_i32, %c0_i32_0 : i32, i32
  }
  func.func @transform_2(%arg0: i32) -> (i32, i32) {
    %c0_i32 = arith.constant 0 : i32
    %c0_i32_0 = arith.constant 0 : i32
    %c0_i32_1 = arith.constant 0 : i32
    return %c0_i32, %c0_i32_0 : i32, i32
  }
  func.func @transform_3(%arg0: i32) -> (i32, i32) {
    %c0_i32 = arith.constant 0 : i32
    %c0_i32_0 = arith.constant 0 : i32
    %c0_i32_1 = arith.constant 0 : i32
    return %c0_i32, %c0_i32_0 : i32, i32
  }
  func.func @transform_4(%arg0: i32) -> (i32, i32) {
    %c0_i32 = arith.constant 0 : i32
    %c0_i32_0 = arith.constant 0 : i32
    %c0_i32_1 = arith.constant 0 : i32
    return %c0_i32, %c0_i32_0 : i32, i32
  }
  func.func @transform_5(%arg0: i32) -> (i32, i32) {
    %c0_i32 = arith.constant 0 : i32
    %c0_i32_0 = arith.constant 0 : i32
    %c0_i32_1 = arith.constant 0 : i32
    return %c0_i32, %c0_i32_0 : i32, i32
  }
  func.func @transform_6(%arg0: i32) -> (i32, i32) {
    %c0_i32 = arith.constant 0 : i32
    %c0_i32_0 = arith.constant 0 : i32
    %c0_i32_1 = arith.constant 0 : i32
    return %c0_i32, %c0_i32_0 : i32, i32
  }
  func.func @transform_7(%arg0: i32) -> (i32, i32, i32) {
    %c0_i32 = arith.constant 0 : i32
    %c0_i32_0 = arith.constant 0 : i32
    %c0_i32_1 = arith.constant 0 : i32
    return %arg0, %c0_i32, %c0_i32_0 : i32, i32, i32
  }
}

</mosaic_0001>

<llo_original>
// kernel: tpu_custom_call.1
$region0: #{tpu_custom_call.1}
  #allocation0 [shape = 'u32[]', space=smem, size = 0x4, offset = 0x4, fixed_abs, tag = 'smem constant byte address 0x4 - core index']
  #allocation1 [shape = 'u32[144,128]{1,0:T(1,128)}', space=vmem, size = 0x12000, scoped, tag = 'internal scratch']
  #allocation2 [shape = 'f32[1,1]{1,0:T(1,128)S(1)}', space=vmem, size = 0x200, scoped, tag = 'scoped memory for tpu_custom_call.1']
  %s0 = inlined_call_operand.hbm [shape: f32[2,32,256], index: 0, kind: input, shape index: {}]
  %s1 = inlined_call_operand.vmem [shape: f32[2,32], index: 1, kind: input, shape index: {}]
  %s2 = inlined_call_operand.vmem [shape: f32[2,1], index: 2, kind: input, shape index: {}]
  %s3 = inlined_call_operand.vmem [shape: f32[32,2], index: 3, kind: input, shape index: {}]
  %s4 = inlined_call_operand.vmem [shape: f32[32,1], index: 4, kind: input, shape index: {}]
  %s5 = inlined_call_operand.vmem [shape: f32[1,32], index: 5, kind: input, shape index: {}]
  %s6 = inlined_call_operand.<no memory space> [shape: f32[1,1], index: 6, kind: input, shape index: {}]
  %s7 = inlined_call_operand.hbm [shape: f32[2,32,256], index: 7, kind: output, shape index: {}]
  %s8 = sld [smem:[#allocation0]]
  $region65: #{tpu_custom_call.1} parent=0
    _
  %s10 = ssub.s32 1, %s8
  %s11 = scalar_select 0, %s10, %s8
  %v12 = vstv %s6
  %13 = vst [vmem:[#allocation2] sm:$0x1] %v12
  $region1: #{tpu_custom_call.1} parent=0
    #allocation3 [shape = 'u8[65536]{0}', space=vmem, size = 0x10000, scoped, tag = 'input window, operand 0']
    #allocation4 [shape = 's32[2]{0}', space=sflag, size = 0x8, scoped, tag = 'scoped memory for tpu_custom_call.1']
    #allocation5 [shape = 's32[2]{0}', space=sflag, size = 0x8, scoped, tag = 'scoped memory for tpu_custom_call.1']
    #allocation6 [shape = 'u8[65536]{0}', space=vmem, size = 0x10000, scoped, tag = 'output window, operand 0']
    %14 = vsyncpa [#allocation4], 0
    %s15 = scalar_lea.sflag [#allocation4], 1
    %16 = vsyncpa %s15, 0
    %17 = vsyncpa [#allocation5], 0
    %s18 = scalar_lea.sflag [#allocation5], 1
    %19 = vsyncpa %s18, 0
    loop: start=0, step=1, limit=4
    $region2: #{tpu_custom_call.1} parent=1 // loop_pre_header
      _
    $region3: #{tpu_custom_call.1} parent=1 // loop_header
      %s21 = sphi 0, %s25
      %p22 = scmp.ge.s32.totalorder %s21, 4
      %s31 = sphi 0, %s33
      %s34 = sphi 0, %s31
      %s35 = sphi 0, %s34
      %s51 = sphi 0, %s35
      %s55 = sphi 0, %s55
      %s57 = sphi 0, %s55
      %s58 = sphi 0, %s57
      %s72 = sphi 0, %s58
      %s76 = sphi 0, %s76
      %s78 = sphi 0, %s76
      %s79 = sphi 0, %s78
      %s93 = sphi 0, %s79
      %s97 = sphi 0, %s97
      %s99 = sphi 0, %s97
      %s100 = sphi 0, %s99
      %s114 = sphi 0, %s100
      %s118 = sphi 0, %s118
      %s120 = sphi 0, %s118
      %s121 = sphi 0, %s120
      %s135 = sphi 0, %s121
      %s139 = sphi 0, %s139
      %s141 = sphi 0, %s139
      %s142 = sphi 0, %s141
      %s156 = sphi 0, %s142
      %s160 = sphi 0, %s160
      %s162 = sphi 0, %s160
      %s163 = sphi 0, %s162
      %s177 = sphi 0, %s163
      %s183 = sphi 0, %s185
      %s186 = sphi 0, %s183
      %s187 = sphi 0, %s186
      %s203 = sphi 0, %s187
    $region4: #{tpu_custom_call.1} parent=1 // loop_header_branch
      %24 = sbr.rel (%p22) target = $region8
    $region5: #{tpu_custom_call.1} parent=1 // loop_body
      %s26 = ssub.s32 %s21, 1
      %s27 = ssub.s32 %s21, 2
      %s28 = sadd.s32 %s21, 1
      %s29 = ssub.s32 %s21, %s28
      %p30 = scmp.eq.s32.totalorder %s29, 0
      %s32 = sadd.s32 %s31, 1
      %s33 = scalar_select %p30, %s31, %s32
      %p36 = pneg %p30
      %p37 = scmp.eq.s32.totalorder %s21, 1
      %p38 = por %p36, %p37
      %p39 = scmp.ne.s32.totalorder %s31, %s34
      %p40 = scmp.eq.s32.totalorder %s21, 0
      %p41 = por %p39, %p40
      %p42 = scmp.ne.s32.totalorder %s31, %s34
      %p43 = scmp.eq.s32.totalorder %s26, 1
      %p44 = por %p42, %p43
      %p45 = scmp.ne.s32.totalorder %s34, %s35
      %p46 = scmp.eq.s32.totalorder %s26, 0
      %p47 = por %p45, %p46
      %p48 = scmp.ne.s32.totalorder %s34, %s35
      %p49 = scmp.eq.s32.totalorder %s27, 1
      %p50 = por %p48, %p49
      %p52 = scmp.ne.s32.totalorder %s35, %s51
      %p53 = scmp.eq.s32.totalorder %s27, 0
      %p54 = por %p52, %p53
      %s56 = sadd.s32 %s55, 1
      %p59 = scmp.eq.s32.totalorder %s21, 1
      %p60 = scmp.ne.s32.totalorder %s55, %s57
      %p61 = scmp.eq.s32.totalorder %s21, 0
      %p62 = por %p60, %p61
      %p63 = scmp.ne.s32.totalorder %s55, %s57
      %p64 = scmp.eq.s32.totalorder %s26, 1
      %p65 = por %p63, %p64
      %p66 = scmp.ne.s32.totalorder %s57, %s58
      %p67 = scmp.eq.s32.totalorder %s26, 0
      %p68 = por %p66, %p67
      %p69 = scmp.ne.s32.totalorder %s57, %s58
      %p70 = scmp.eq.s32.totalorder %s27, 1
      %p71 = por %p69, %p70
      %p73 = scmp.ne.s32.totalorder %s58, %s72
      %p74 = scmp.eq.s32.totalorder %s27, 0
      %p75 = por %p73, %p74
      %s77 = sadd.s32 %s76, 1
      %p80 = scmp.eq.s32.totalorder %s21, 1
      %p81 = scmp.ne.s32.totalorder %s76, %s78
      %p82 = scmp.eq.s32.totalorder %s21, 0
      %p83 = por %p81, %p82
      %p84 = scmp.ne.s32.totalorder %s76, %s78
      %p85 = scmp.eq.s32.totalorder %s26, 1
      %p86 = por %p84, %p85
      %p87 = scmp.ne.s32.totalorder %s78, %s79
      %p88 = scmp.eq.s32.totalorder %s26, 0
      %p89 = por %p87, %p88
      %p90 = scmp.ne.s32.totalorder %s78, %s79
      %p91 = scmp.eq.s32.totalorder %s27, 1
      %p92 = por %p90, %p91
      %p94 = scmp.ne.s32.totalorder %s79, %s93
      %p95 = scmp.eq.s32.totalorder %s27, 0
      %p96 = por %p94, %p95
      %s98 = sadd.s32 %s97, 1
      %p101 = scmp.eq.s32.totalorder %s21, 1
      %p102 = scmp.ne.s32.totalorder %s97, %s99
      %p103 = scmp.eq.s32.totalorder %s21, 0
      %p104 = por %p102, %p103
      %p105 = scmp.ne.s32.totalorder %s97, %s99
      %p106 = scmp.eq.s32.totalorder %s26, 1
      %p107 = por %p105, %p106
      %p108 = scmp.ne.s32.totalorder %s99, %s100
      %p109 = scmp.eq.s32.totalorder %s26, 0
      %p110 = por %p108, %p109
      %p111 = scmp.ne.s32.totalorder %s99, %s100
      %p112 = scmp.eq.s32.totalorder %s27, 1
      %p113 = por %p111, %p112
      %p115 = scmp.ne.s32.totalorder %s100, %s114
      %p116 = scmp.eq.s32.totalorder %s27, 0
      %p117 = por %p115, %p116
      %s119 = sadd.s32 %s118, 1
      %p122 = scmp.eq.s32.totalorder %s21, 1
      %p123 = scmp.ne.s32.totalorder %s118, %s120
      %p124 = scmp.eq.s32.totalorder %s21, 0
      %p125 = por %p123, %p124
      %p126 = scmp.ne.s32.totalorder %s118, %s120
      %p127 = scmp.eq.s32.totalorder %s26, 1
      %p128 = por %p126, %p127
      %p129 = scmp.ne.s32.totalorder %s120, %s121
      %p130 = scmp.eq.s32.totalorder %s26, 0
      %p131 = por %p129, %p130
      %p132 = scmp.ne.s32.totalorder %s120, %s121
      %p133 = scmp.eq.s32.totalorder %s27, 1
      %p134 = por %p132, %p133
      %p136 = scmp.ne.s32.totalorder %s121, %s135
      %p137 = scmp.eq.s32.totalorder %s27, 0
      %p138 = por %p136, %p137
      %s140 = sadd.s32 %s139, 1
      %p143 = scmp.eq.s32.totalorder %s21, 1
      %p144 = scmp.ne.s32.totalorder %s139, %s141
      %p145 = scmp.eq.s32.totalorder %s21, 0
      %p146 = por %p144, %p145
      %p147 = scmp.ne.s32.totalorder %s139, %s141
      %p148 = scmp.eq.s32.totalorder %s26, 1
      %p149 = por %p147, %p148
      %p150 = scmp.ne.s32.totalorder %s141, %s142
      %p151 = scmp.eq.s32.totalorder %s26, 0
      %p152 = por %p150, %p151
      %p153 = scmp.ne.s32.totalorder %s141, %s142
      %p154 = scmp.eq.s32.totalorder %s27, 1
      %p155 = por %p153, %p154
      %p157 = scmp.ne.s32.totalorder %s142, %s156
      %p158 = scmp.eq.s32.totalorder %s27, 0
      %p159 = por %p157, %p158
      %s161 = sadd.s32 %s160, 1
      %p164 = scmp.eq.s32.totalorder %s21, 1
      %p165 = scmp.ne.s32.totalorder %s160, %s162
      %p166 = scmp.eq.s32.totalorder %s21, 0
      %p167 = por %p165, %p166
      %p168 = scmp.ne.s32.totalorder %s160, %s162
      %p169 = scmp.eq.s32.totalorder %s26, 1
      %p170 = por %p168, %p169
      %p171 = scmp.ne.s32.totalorder %s162, %s163
      %p172 = scmp.eq.s32.totalorder %s26, 0
      %p173 = por %p171, %p172
      %p174 = scmp.ne.s32.totalorder %s162, %s163
      %p175 = scmp.eq.s32.totalorder %s27, 1
      %p176 = por %p174, %p175
      %p178 = scmp.ne.s32.totalorder %s163, %s177
      %p179 = scmp.eq.s32.totalorder %s27, 0
      %p180 = por %p178, %p179
      %s181 = ssub.s32 %s21, %s28
      %p182 = scmp.eq.s32.totalorder %s181, 0
      %s184 = sadd.s32 %s183, 1
      %s185 = scalar_select %p182, %s183, %s184
      %p188 = pneg %p182
      %p189 = scmp.eq.s32.totalorder %s21, 1
      %p190 = por %p188, %p189
      %p191 = scmp.ne.s32.totalorder %s183, %s186
      %p192 = scmp.eq.s32.totalorder %s21, 0
      %p193 = por %p191, %p192
      %p194 = scmp.ne.s32.totalorder %s183, %s186
      %p195 = scmp.eq.s32.totalorder %s26, 1
      %p196 = por %p194, %p195
      %p197 = scmp.ne.s32.totalorder %s186, %s187
      %p198 = scmp.eq.s32.totalorder %s26, 0
      %p199 = por %p197, %p198
      %p200 = scmp.ne.s32.totalorder %s186, %s187
      %p201 = scmp.eq.s32.totalorder %s27, 1
      %p202 = por %p200, %p201
      %p204 = scmp.ne.s32.totalorder %s187, %s203
      %p205 = scmp.eq.s32.totalorder %s27, 0
      %p206 = por %p204, %p205
      %p207 = scmp.le.s32.totalorder 1, %s21
      %p208 = scmp.lt.s32.totalorder %s21, 3
      %p209 = pnand %p207, %p208
      %p210 = pneg %p209
      // Predicated region
      $region9: #{tpu_custom_call.1} parent=5 // pred_check
        _
      $region10: #{tpu_custom_call.1} parent=5 // pred_check_branch
        %212 = sbr.rel (%p209) target = $region12
      $region11: #{tpu_custom_call.1} parent=5 // pred_region
        %s213 = ssub.s32 %s21, 1
        // Predicated region
        $region13: #{tpu_custom_call.1} parent=11 // pred_check
          %p214 = pneg %p68
        $region14: #{tpu_custom_call.1} parent=11 // pred_check_branch
          %216 = sbr.rel (%p214) target = $region16
        $region15: #{tpu_custom_call.1} parent=11 // pred_region
          _
        $region16: #{tpu_custom_call.1} parent=11 // pred_fallthru
          _
        // Predicated region
        $region17: #{tpu_custom_call.1} parent=11 // pred_check
          %p217 = pneg %p89
        $region18: #{tpu_custom_call.1} parent=11 // pred_check_branch
          %219 = sbr.rel (%p217) target = $region20
        $region19: #{tpu_custom_call.1} parent=11 // pred_region
          _
        $region20: #{tpu_custom_call.1} parent=11 // pred_fallthru
          _
        // Predicated region
        $region21: #{tpu_custom_call.1} parent=11 // pred_check
          %p220 = pneg %p110
        $region22: #{tpu_custom_call.1} parent=11 // pred_check_branch
          %222 = sbr.rel (%p220) target = $region24
        $region23: #{tpu_custom_call.1} parent=11 // pred_region
          _
        $region24: #{tpu_custom_call.1} parent=11 // pred_fallthru
          _
        // Predicated region
        $region25: #{tpu_custom_call.1} parent=11 // pred_check
          %p223 = pneg %p131
        $region26: #{tpu_custom_call.1} parent=11 // pred_check_branch
          %225 = sbr.rel (%p223) target = $region28
        $region27: #{tpu_custom_call.1} parent=11 // pred_region
          _
        $region28: #{tpu_custom_call.1} parent=11 // pred_fallthru
          _
        // Predicated region
        $region29: #{tpu_custom_call.1} parent=11 // pred_check
          %p226 = pneg %p152
        $region30: #{tpu_custom_call.1} parent=11 // pred_check_branch
          %228 = sbr.rel (%p226) target = $region32
        $region31: #{tpu_custom_call.1} parent=11 // pred_region
          _
        $region32: #{tpu_custom_call.1} parent=11 // pred_fallthru
          _
        // Predicated region
        $region33: #{tpu_custom_call.1} parent=11 // pred_check
          %p229 = pneg %p173
        $region34: #{tpu_custom_call.1} parent=11 // pred_check_branch
          %231 = sbr.rel (%p229) target = $region36
        $region35: #{tpu_custom_call.1} parent=11 // pred_region
          _
        $region36: #{tpu_custom_call.1} parent=11 // pred_fallthru
          _
      $region12: #{tpu_custom_call.1} parent=5 // pred_fallthru
        _
      %p232 = scmp.lt.s32.totalorder %s21, 2
      // Predicated region
      $region37: #{tpu_custom_call.1} parent=5 // pred_check
        %p233 = pneg %p232
      $region38: #{tpu_custom_call.1} parent=5 // pred_check_branch
        %235 = sbr.rel (%p233) target = $region40
      $region39: #{tpu_custom_call.1} parent=5 // pred_region
        // Predicated region
        $region41: #{tpu_custom_call.1} parent=39 // pred_check
          %p236 = pneg %p41
        $region42: #{tpu_custom_call.1} parent=39 // pred_check_branch
          %238 = sbr.rel (%p236) target = $region44
        $region43: #{tpu_custom_call.1} parent=39 // pred_region
          %s239 = sand.u32 %s31, 1
          %s240 = scalar_lea.sflag [#allocation4], %s239
          %s241 = sand.u32 %s31, 1
          %s242 = smul.addr %s241, 64
          %s243 = scalar_lea.vmem [#allocation3], %s242
          %s245 = ssub.s32 1024, 1024
          %246 = vsyncadd %s240, %s245
          %s247 = smul.addr %s21, 8
          %s248 = smul.addr %s247, 128
          %s249 = scalar_lea.hbm %s0, %s248
          %s250 = sshll.u32 %s243, 4
          %s251 = int_to_ptr.vmem [resolvable:$true] %s250
          %256 = dma.hbm_to_vmem [thread:$0]  %s249, 1024, %s251, %s240, 256, 256, 16
        $region44: #{tpu_custom_call.1} parent=39 // pred_fallthru
          _
      $region40: #{tpu_custom_call.1} parent=5 // pred_fallthru
        _
      %p257 = scmp.le.s32.totalorder 1, %s21
      %p258 = scmp.lt.s32.totalorder %s21, 3
      %p259 = pnand %p257, %p258
      %p260 = pneg %p259
      // Predicated region
      $region45: #{tpu_custom_call.1} parent=5 // pred_check
        _
      $region46: #{tpu_custom_call.1} parent=5 // pred_check_branch
        %262 = sbr.rel (%p259) target = $region48
      $region47: #{tpu_custom_call.1} parent=5 // pred_region
        %s263 = ssub.s32 %s21, 1
        %s264 = sand.u32 %s34, 1
        %s265 = scalar_lea.sflag [#allocation4], %s264
        %s266 = sand.u32 %s34, 1
        %s267 = smul.addr %s266, 64
        %s268 = scalar_lea.vmem [#allocation3], %s267
        // Predicated region
        $region49: #{tpu_custom_call.1} parent=47 // pred_check
          %p269 = pneg %p47
        $region50: #{tpu_custom_call.1} parent=47 // pred_check_branch
          %271 = sbr.rel (%p269) target = $region52
        $region51: #{tpu_custom_call.1} parent=47 // pred_region
          %272 = dma.done %s265, 1024
        $region52: #{tpu_custom_call.1} parent=47 // pred_fallthru
          _
        %s273 = sand.u32 %s34, 1
        %s274 = scalar_lea.sflag [#allocation4], %s273
        %s275 = sand.u32 %s34, 1
        %s276 = smul.addr %s275, 64
        %s277 = scalar_lea.vmem [#allocation3], %s276
        %p278 = pneg %p47
        %p279 = pneg %p44
        %p280 = pneg %p68
        %p281 = pneg %p65
        %p282 = pneg %p89
        %p283 = pneg %p86
        %p284 = pneg %p110
        %p285 = pneg %p107
        %p286 = pneg %p131
        %p287 = pneg %p128
        %p288 = pneg %p152
        %p289 = pneg %p149
        %p290 = pneg %p173
        %p291 = pneg %p170
        %p292 = pneg %p199
        %p293 = pneg %p196
        %s294 = sand.u32 %s186, 1
        %s295 = scalar_lea.sflag [#allocation5], %s294
        %s296 = sand.u32 %s186, 1
        %s297 = smul.addr %s296, 64
        %s298 = scalar_lea.vmem [#allocation6], %s297
        %v299 = vld [vmem:[%s268] sm:$0xff]
        %v300 = vld [vmem:[%s268 + $0x8] sm:$0xff]
        %v301 = vld [vmem:[%s268 + $0x10] sm:$0xff]
        %v302 = vld [vmem:[%s268 + $0x18] sm:$0xff]
        %v303 = vld [vmem:[%s268 + $0x20] sm:$0xff]
        %v304 = vld [vmem:[%s268 + $0x28] sm:$0xff]
        %v305 = vld [vmem:[%s268 + $0x30] sm:$0xff]
        %v306 = vld [vmem:[%s268 + $0x38] sm:$0xff]
        %v307 = vadd.f32 %v299, %v300
        %308 = vadd.xlane.f32.xlu0 %v307
        %v309 = vpop.xlane.xlu0 %308
        %v310 = vadd.f32 %v301, %v302
        %311 = vadd.xlane.f32.xlu0 %v310
        %v312 = vpop.xlane.xlu0 %311
        %v313 = vadd.f32 %v303, %v304
        %314 = vadd.xlane.f32.xlu0 %v313
        %v315 = vpop.xlane.xlu0 %314
        %v316 = vadd.f32 %v305, %v306
        %317 = vadd.xlane.f32.xlu0 %v316
        %v318 = vpop.xlane.xlu0 %317
        %v319 = vmul.f32 %v309, 0.00390625
        %v320 = vmul.f32 %v312, 0.00390625
        %v321 = vmul.f32 %v315, 0.00390625
        %v322 = vmul.f32 %v318, 0.00390625
        %v323 = vld [vmem:[%s1] sm:$0x3]
        %v324 = vld [vmem:[%s2] sm:$0x3]
        %vm325 = vcmask 261120
        %v327 = vsel %vm325, %v323, 0
        %329 = vmatprep.subr.mxu0 0.0
        %330 = vmatpush1.msra.mxu0 0.0
        %331 = vmatprep.subr.mxu0 0.0
        %332 = vmatpush1.msra.mxu0 0.0
        %333 = vmatprep.subr.mxu0 0.0
        %334 = vmatpush1.msra.mxu0 0.0
        %335 = vmatprep.subr.mxu0 0.0
        %336 = vmatpush1.msra.mxu0 0.0
        %337 = vmatprep.subr.mxu0 0.0
        %338 = vmatpush1.msra.mxu0 0.0
        %339 = vmatprep.subr.mxu0 0.0
        %340 = vmatpush1.msra.mxu0 0.0
        %341 = vmatprep.subr.mxu0 0.0
        %342 = vmatpush1.msra.mxu0 0.0
        %343 = vmatprep.subr.mxu0 0.0
        %344 = vmatpush1.msra.mxu0 0.0
        %345 = vmatprep.subr.mxu0 0.0
        %346 = vmatpush1.msra.mxu0 0.0
        %347 = vmatprep.subr.mxu0 0.0
        %348 = vmatpush1.msra.mxu0 0.0
        %349 = vmatprep.subr.mxu0 0.0
        %350 = vmatpush1.msra.mxu0 0.0
        %351 = vmatprep.subr.mxu0 0.0
        %352 = vmatpush1.msra.mxu0 0.0
        %353 = vmatprep.subr.mxu0 0.0
        %v354 = vand.u32 %v322, 4294901760
        %355 = vmatpush1.msra.mxu0 %v354
        %356 = vmatprep.subr.mxu0 0.0
        %v357 = vand.u32 %v321, 4294901760
        %358 = vmatpush1.msra.mxu0 %v357
        %359 = vmatprep.subr.mxu0 0.0
        %v360 = vand.u32 %v320, 4294901760
        %361 = vmatpush1.msra.mxu0 %v360
        %362 = vmatprep.subr.mxu0 0.0
        %v363 = vand.u32 %v319, 4294901760
        %364 = vmatpush1.msra.mxu0 %v363
        %365 = vmatprep.subr.mxu0 0.0
        %366 = vmatpush2.msra.mxu0 0.0
        %367 = vmatprep.subr.mxu0 0.0
        %368 = vmatpush2.msra.mxu0 0.0
        %369 = vmatprep.subr.mxu0 0.0
        %370 = vmatpush2.msra.mxu0 0.0
        %371 = vmatprep.subr.mxu0 0.0
        %372 = vmatpush2.msra.mxu0 0.0
        %373 = vmatprep.subr.mxu0 0.0
        %374 = vmatpush2.msra.mxu0 0.0
        %375 = vmatprep.subr.mxu0 0.0
        %376 = vmatpush2.msra.mxu0 0.0
        %377 = vmatprep.subr.mxu0 0.0
        %378 = vmatpush2.msra.mxu0 0.0
        %379 = vmatprep.subr.mxu0 0.0
        %380 = vmatpush2.msra.mxu0 0.0
        %381 = vmatprep.subr.mxu0 0.0
        %382 = vmatpush2.msra.mxu0 0.0
        %383 = vmatprep.subr.mxu0 0.0
        %384 = vmatpush2.msra.mxu0 0.0
        %385 = vmatprep.subr.mxu0 0.0
        %386 = vmatpush2.msra.mxu0 0.0
        %387 = vmatprep.subr.mxu0 0.0
        %388 = vmatpush2.msra.mxu0 0.0
        %389 = vmatprep.subr.mxu0 0.0
        %390 = vmatpush2.msra.mxu0 0.0
        %391 = vmatprep.subr.mxu0 0.0
        %392 = vmatpush2.msra.mxu0 0.0
        %393 = vmatprep.subr.mxu0 0.0
        %394 = vmatpush2.msra.mxu0 0.0
        %395 = vmatprep.subr.mxu0 0.0
        %396 = vmatpush2.msra.mxu0 0.0
        %397 = vmatprep.mubr.f32.mxu0 0.0
        %v398 = vand.u32 %v327, 4294901760
        %v399 = vsub.f32 %v327, %v398
        %v400 = vand.u32 %v399, 4294901760
        %v401 = vsub.f32 %v399, %v400
        %v402 = vand.u32 %v401, 4294901760
        %403 = vmatmul.mubr.f32.gmra.mxu0 %v402
        %v404 = vpop.f32.mrf.mxu0
        %v405 = vadd.f32 %v324, %v404
        %v406 = vpop.f32.mrf.mxu0
        %407 = vdwg.mxu0
        %408 = vmatprep.subr.mxu0 0.0
        %409 = vmatpush1.msra.mxu0 0.0
        %410 = vmatprep.subr.mxu0 0.0
        %411 = vmatpush1.msra.mxu0 0.0
        %412 = vmatprep.subr.mxu0 0.0
        %413 = vmatpush1.msra.mxu0 0.0
        %414 = vmatprep.subr.mxu0 0.0
        %415 = vmatpush1.msra.mxu0 0.0
        %416 = vmatprep.subr.mxu0 0.0
        %417 = vmatpush1.msra.mxu0 0.0
        %418 = vmatprep.subr.mxu0 0.0
        %419 = vmatpush1.msra.mxu0 0.0
        %420 = vmatprep.subr.mxu0 0.0
        %421 = vmatpush1.msra.mxu0 0.0
        %422 = vmatprep.subr.mxu0 0.0
        %423 = vmatpush1.msra.mxu0 0.0
        %424 = vmatprep.subr.mxu0 0.0
        %425 = vmatpush1.msra.mxu0 0.0
        %426 = vmatprep.subr.mxu0 0.0
        %427 = vmatpush1.msra.mxu0 0.0
        %428 = vmatprep.subr.mxu0 0.0
        %429 = vmatpush1.msra.mxu0 0.0
        %430 = vmatprep.subr.mxu0 0.0
        %431 = vmatpush1.msra.mxu0 0.0
        %432 = vmatprep.subr.mxu0 0.0
        %v433 = vand.u32 %v322, 4294901760
        %v434 = vsub.f32 %v322, %v433
        %v435 = vand.u32 %v434, 4294901760
        %v436 = vsub.f32 %v434, %v435
        %v437 = vand.u32 %v436, 4294901760
        %438 = vmatpush1.msra.mxu0 %v437
        %439 = vmatprep.subr.mxu0 0.0
        %v440 = vand.u32 %v321, 4294901760
        %v441 = vsub.f32 %v321, %v440
        %v442 = vand.u32 %v441, 4294901760
        %v443 = vsub.f32 %v441, %v442
        %v444 = vand.u32 %v443, 4294901760
        %445 = vmatpush1.msra.mxu0 %v444
        %446 = vmatprep.subr.mxu0 0.0
        %v447 = vand.u32 %v320, 4294901760
        %v448 = vsub.f32 %v320, %v447
        %v449 = vand.u32 %v448, 4294901760
        %v450 = vsub.f32 %v448, %v449
        %v451 = vand.u32 %v450, 4294901760
        %452 = vmatpush1.msra.mxu0 %v451
        %453 = vmatprep.subr.mxu0 0.0
        %v454 = vand.u32 %v319, 4294901760
        %v455 = vsub.f32 %v319, %v454
        %v456 = vand.u32 %v455, 4294901760
        %v457 = vsub.f32 %v455, %v456
        %v458 = vand.u32 %v457, 4294901760
        %459 = vmatpush1.msra.mxu0 %v458
        %460 = vmatprep.subr.mxu0 0.0
        %461 = vmatpush2.msra.mxu0 0.0
        %462 = vmatprep.subr.mxu0 0.0
        %463 = vmatpush2.msra.mxu0 0.0
        %464 = vmatprep.subr.mxu0 0.0
        %465 = vmatpush2.msra.mxu0 0.0
        %466 = vmatprep.subr.mxu0 0.0
        %467 = vmatpush2.msra.mxu0 0.0
        %468 = vmatprep.subr.mxu0 0.0
        %469 = vmatpush2.msra.mxu0 0.0
        %470 = vmatprep.subr.mxu0 0.0
        %471 = vmatpush2.msra.mxu0 0.0
        %472 = vmatprep.subr.mxu0 0.0
        %473 = vmatpush2.msra.mxu0 0.0
        %474 = vmatprep.subr.mxu0 0.0
        %475 = vmatpush2.msra.mxu0 0.0
        %476 = vmatprep.subr.mxu0 0.0
        %477 = vmatpush2.msra.mxu0 0.0
        %478 = vmatprep.subr.mxu0 0.0
        %479 = vmatpush2.msra.mxu0 0.0
        %480 = vmatprep.subr.mxu0 0.0
        %481 = vmatpush2.msra.mxu0 0.0
        %482 = vmatprep.subr.mxu0 0.0
        %483 = vmatpush2.msra.mxu0 0.0
        %484 = vmatprep.subr.mxu0 0.0
        %485 = vmatpush2.msra.mxu0 0.0
        %486 = vmatprep.subr.mxu0 0.0
        %487 = vmatpush2.msra.mxu0 0.0
        %488 = vmatprep.subr.mxu0 0.0
        %489 = vmatpush2.msra.mxu0 0.0
        %490 = vmatprep.subr.mxu0 0.0
        %491 = vmatpush2.msra.mxu0 0.0
        %492 = vmatprep.mubr.f32.mxu0 0.0
        %v493 = vand.u32 %v327, 4294901760
        %494 = vmatmul.mubr.f32.gmra.mxu0 %v493
        %v495 = vpop.f32.mrf.mxu0
        %v496 = vadd.f32 %v405, %v495
        %v497 = vpop.f32.mrf.mxu0
        %498 = vdwg.mxu0
        %499 = vmatprep.subr.mxu0 0.0
        %500 = vmatpush1.msra.mxu0 0.0
        %501 = vmatprep.subr.mxu0 0.0
        %502 = vmatpush1.msra.mxu0 0.0
        %503 = vmatprep.subr.mxu0 0.0
        %504 = vmatpush1.msra.mxu0 0.0
        %505 = vmatprep.subr.mxu0 0.0
        %506 = vmatpush1.msra.mxu0 0.0
        %507 = vmatprep.subr.mxu0 0.0
        %508 = vmatpush1.msra.mxu0 0.0
        %509 = vmatprep.subr.mxu0 0.0
        %510 = vmatpush1.msra.mxu0 0.0
        %511 = vmatprep.subr.mxu0 0.0
        %512 = vmatpush1.msra.mxu0 0.0
        %513 = vmatprep.subr.mxu0 0.0
        %514 = vmatpush1.msra.mxu0 0.0
        %515 = vmatprep.subr.mxu0 0.0
        %516 = vmatpush1.msra.mxu0 0.0
        %517 = vmatprep.subr.mxu0 0.0
        %518 = vmatpush1.msra.mxu0 0.0
        %519 = vmatprep.subr.mxu0 0.0
        %520 = vmatpush1.msra.mxu0 0.0
        %521 = vmatprep.subr.mxu0 0.0
        %522 = vmatpush1.msra.mxu0 0.0
        %523 = vmatprep.subr.mxu0 0.0
        %v524 = vand.u32 %v322, 4294901760
        %v525 = vsub.f32 %v322, %v524
        %526 = vmatpush1.msra.mxu0 %v525
        %527 = vmatprep.subr.mxu0 0.0
        %v528 = vand.u32 %v321, 4294901760
        %v529 = vsub.f32 %v321, %v528
        %530 = vmatpush1.msra.mxu0 %v529
        %531 = vmatprep.subr.mxu0 0.0
        %v532 = vand.u32 %v320, 4294901760
        %v533 = vsub.f32 %v320, %v532
        %534 = vmatpush1.msra.mxu0 %v533
        %535 = vmatprep.subr.mxu0 0.0
        %v536 = vand.u32 %v319, 4294901760
        %v537 = vsub.f32 %v319, %v536
        %538 = vmatpush1.msra.mxu0 %v537
        %539 = vmatprep.subr.mxu0 0.0
        %540 = vmatpush2.msra.mxu0 0.0
        %541 = vmatprep.subr.mxu0 0.0
        %542 = vmatpush2.msra.mxu0 0.0
        %543 = vmatprep.subr.mxu0 0.0
        %544 = vmatpush2.msra.mxu0 0.0
        %545 = vmatprep.subr.mxu0 0.0
        %546 = vmatpush2.msra.mxu0 0.0
        %547 = vmatprep.subr.mxu0 0.0
        %548 = vmatpush2.msra.mxu0 0.0
        %549 = vmatprep.subr.mxu0 0.0
        %550 = vmatpush2.msra.mxu0 0.0
        %551 = vmatprep.subr.mxu0 0.0
        %552 = vmatpush2.msra.mxu0 0.0
        %553 = vmatprep.subr.mxu0 0.0
        %554 = vmatpush2.msra.mxu0 0.0
        %555 = vmatprep.subr.mxu0 0.0
        %556 = vmatpush2.msra.mxu0 0.0
        %557 = vmatprep.subr.mxu0 0.0
        %558 = vmatpush2.msra.mxu0 0.0
        %559 = vmatprep.subr.mxu0 0.0
        %560 = vmatpush2.msra.mxu0 0.0
        %561 = vmatprep.subr.mxu0 0.0
        %562 = vmatpush2.msra.mxu0 0.0
        %563 = vmatprep.subr.mxu0 0.0
        %564 = vmatpush2.msra.mxu0 0.0
        %565 = vmatprep.subr.mxu0 0.0
        %566 = vmatpush2.msra.mxu0 0.0
        %567 = vmatprep.subr.mxu0 0.0
        %568 = vmatpush2.msra.mxu0 0.0
        %569 = vmatprep.subr.mxu0 0.0
        %570 = vmatpush2.msra.mxu0 0.0
        %571 = vmatprep.mubr.f32.mxu0 0.0
        %v572 = vand.u32 %v327, 4294901760
        %v573 = vsub.f32 %v327, %v572
        %574 = vmatmul.mubr.f32.gmra.mxu0 %v573
        %v575 = vpop.f32.mrf.mxu0
        %v576 = vadd.f32 %v496, %v575
        %v577 = vpop.f32.mrf.mxu0
        %578 = vdwg.mxu0
        %579 = vmatprep.subr.mxu0 0.0
        %580 = vmatpush1.msra.mxu0 0.0
        %581 = vmatprep.subr.mxu0 0.0
        %582 = vmatpush1.msra.mxu0 0.0
        %583 = vmatprep.subr.mxu0 0.0
        %584 = vmatpush1.msra.mxu0 0.0
        %585 = vmatprep.subr.mxu0 0.0
        %586 = vmatpush1.msra.mxu0 0.0
        %587 = vmatprep.subr.mxu0 0.0
        %588 = vmatpush1.msra.mxu0 0.0
        %589 = vmatprep.subr.mxu0 0.0
        %590 = vmatpush1.msra.mxu0 0.0
        %591 = vmatprep.subr.mxu0 0.0
        %592 = vmatpush1.msra.mxu0 0.0
        %593 = vmatprep.subr.mxu0 0.0
        %594 = vmatpush1.msra.mxu0 0.0
        %595 = vmatprep.subr.mxu0 0.0
        %596 = vmatpush1.msra.mxu0 0.0
        %597 = vmatprep.subr.mxu0 0.0
        %598 = vmatpush1.msra.mxu0 0.0
        %599 = vmatprep.subr.mxu0 0.0
        %600 = vmatpush1.msra.mxu0 0.0
        %601 = vmatprep.subr.mxu0 0.0
        %602 = vmatpush1.msra.mxu0 0.0
        %603 = vmatprep.subr.mxu0 0.0
        %v604 = vand.u32 %v322, 4294901760
        %605 = vmatpush1.msra.mxu0 %v604
        %606 = vmatprep.subr.mxu0 0.0
        %v607 = vand.u32 %v321, 4294901760
        %608 = vmatpush1.msra.mxu0 %v607
        %609 = vmatprep.subr.mxu0 0.0
        %v610 = vand.u32 %v320, 4294901760
        %611 = vmatpush1.msra.mxu0 %v610
        %612 = vmatprep.subr.mxu0 0.0
        %v613 = vand.u32 %v319, 4294901760
        %614 = vmatpush1.msra.mxu0 %v613
        %615 = vmatprep.subr.mxu0 0.0
        %616 = vmatpush2.msra.mxu0 0.0
        %617 = vmatprep.subr.mxu0 0.0
        %618 = vmatpush2.msra.mxu0 0.0
        %619 = vmatprep.subr.mxu0 0.0
        %620 = vmatpush2.msra.mxu0 0.0
        %621 = vmatprep.subr.mxu0 0.0
        %622 = vmatpush2.msra.mxu0 0.0
        %623 = vmatprep.subr.mxu0 0.0
        %624 = vmatpush2.msra.mxu0 0.0
        %625 = vmatprep.subr.mxu0 0.0
        %626 = vmatpush2.msra.mxu0 0.0
        %627 = vmatprep.subr.mxu0 0.0
        %628 = vmatpush2.msra.mxu0 0.0
        %629 = vmatprep.subr.mxu0 0.0
        %630 = vmatpush2.msra.mxu0 0.0
        %631 = vmatprep.subr.mxu0 0.0
        %632 = vmatpush2.msra.mxu0 0.0
        %633 = vmatprep.subr.mxu0 0.0
        %634 = vmatpush2.msra.mxu0 0.0
        %635 = vmatprep.subr.mxu0 0.0
        %636 = vmatpush2.msra.mxu0 0.0
        %637 = vmatprep.subr.mxu0 0.0
        %638 = vmatpush2.msra.mxu0 0.0
        %639 = vmatprep.subr.mxu0 0.0
        %640 = vmatpush2.msra.mxu0 0.0
        %641 = vmatprep.subr.mxu0 0.0
        %642 = vmatpush2.msra.mxu0 0.0
        %643 = vmatprep.subr.mxu0 0.0
        %644 = vmatpush2.msra.mxu0 0.0
        %645 = vmatprep.subr.mxu0 0.0
        %646 = vmatpush2.msra.mxu0 0.0
        %647 = vmatprep.mubr.f32.mxu0 0.0
        %v648 = vand.u32 %v327, 4294901760
        %v649 = vsub.f32 %v327, %v648
        %v650 = vand.u32 %v649, 4294901760
        %651 = vmatmul.mubr.f32.gmra.mxu0 %v650
        %v652 = vpop.f32.mrf.mxu0
        %v653 = vadd.f32 %v576, %v652
        %v654 = vpop.f32.mrf.mxu0
        %655 = vdwg.mxu0
        %656 = vmatprep.subr.mxu0 0.0
        %657 = vmatpush1.msra.mxu0 0.0
        %658 = vmatprep.subr.mxu0 0.0
        %659 = vmatpush1.msra.mxu0 0.0
        %660 = vmatprep.subr.mxu0 0.0
        %661 = vmatpush1.msra.mxu0 0.0
        %662 = vmatprep.subr.mxu0 0.0
        %663 = vmatpush1.msra.mxu0 0.0
        %664 = vmatprep.subr.mxu0 0.0
        %665 = vmatpush1.msra.mxu0 0.0
        %666 = vmatprep.subr.mxu0 0.0
        %667 = vmatpush1.msra.mxu0 0.0
        %668 = vmatprep.subr.mxu0 0.0
        %669 = vmatpush1.msra.mxu0 0.0
        %670 = vmatprep.subr.mxu0 0.0
        %671 = vmatpush1.msra.mxu0 0.0
        %672 = vmatprep.subr.mxu0 0.0
        %673 = vmatpush1.msra.mxu0 0.0
        %674 = vmatprep.subr.mxu0 0.0
        %675 = vmatpush1.msra.mxu0 0.0
        %676 = vmatprep.subr.mxu0 0.0
        %677 = vmatpush1.msra.mxu0 0.0
        %678 = vmatprep.subr.mxu0 0.0
        %679 = vmatpush1.msra.mxu0 0.0
        %680 = vmatprep.subr.mxu0 0.0
        %v681 = vand.u32 %v322, 4294901760
        %v682 = vsub.f32 %v322, %v681
        %v683 = vand.u32 %v682, 4294901760
        %684 = vmatpush1.msra.mxu0 %v683
        %685 = vmatprep.subr.mxu0 0.0
        %v686 = vand.u32 %v321, 4294901760
        %v687 = vsub.f32 %v321, %v686
        %v688 = vand.u32 %v687, 4294901760
        %689 = vmatpush1.msra.mxu0 %v688
        %690 = vmatprep.subr.mxu0 0.0
        %v691 = vand.u32 %v320, 4294901760
        %v692 = vsub.f32 %v320, %v691
        %v693 = vand.u32 %v692, 4294901760
        %694 = vmatpush1.msra.mxu0 %v693
        %695 = vmatprep.subr.mxu0 0.0
        %v696 = vand.u32 %v319, 4294901760
        %v697 = vsub.f32 %v319, %v696
        %v698 = vand.u32 %v697, 4294901760
        %699 = vmatpush1.msra.mxu0 %v698
        %700 = vmatprep.subr.mxu0 0.0
        %701 = vmatpush2.msra.mxu0 0.0
        %702 = vmatprep.subr.mxu0 0.0
        %703 = vmatpush2.msra.mxu0 0.0
        %704 = vmatprep.subr.mxu0 0.0
        %705 = vmatpush2.msra.mxu0 0.0
        %706 = vmatprep.subr.mxu0 0.0
        %707 = vmatpush2.msra.mxu0 0.0
        %708 = vmatprep.subr.mxu0 0.0
        %709 = vmatpush2.msra.mxu0 0.0
        %710 = vmatprep.subr.mxu0 0.0
        %711 = vmatpush2.msra.mxu0 0.0
        %712 = vmatprep.subr.mxu0 0.0
        %713 = vmatpush2.msra.mxu0 0.0
        %714 = vmatprep.subr.mxu0 0.0
        %715 = vmatpush2.msra.mxu0 0.0
        %716 = vmatprep.subr.mxu0 0.0
        %717 = vmatpush2.msra.mxu0 0.0
        %718 = vmatprep.subr.mxu0 0.0
        %719 = vmatpush2.msra.mxu0 0.0
        %720 = vmatprep.subr.mxu0 0.0
        %721 = vmatpush2.msra.mxu0 0.0
        %722 = vmatprep.subr.mxu0 0.0
        %723 = vmatpush2.msra.mxu0 0.0
        %724 = vmatprep.subr.mxu0 0.0
        %725 = vmatpush2.msra.mxu0 0.0
        %726 = vmatprep.subr.mxu0 0.0
        %727 = vmatpush2.msra.mxu0 0.0
        %728 = vmatprep.subr.mxu0 0.0
        %729 = vmatpush2.msra.mxu0 0.0
        %730 = vmatprep.subr.mxu0 0.0
        %731 = vmatpush2.msra.mxu0 0.0
        %732 = vmatprep.mubr.f32.mxu0 0.0
        %v733 = vand.u32 %v327, 4294901760
        %734 = vmatmul.mubr.f32.gmra.mxu0 %v733
        %v735 = vpop.f32.mrf.mxu0
        %v736 = vadd.f32 %v653, %v735
        %v737 = vpop.f32.mrf.mxu0
        %738 = vdwg.mxu0
        %739 = vmatprep.subr.mxu0 0.0
        %740 = vmatpush1.msra.mxu0 0.0
        %741 = vmatprep.subr.mxu0 0.0
        %742 = vmatpush1.msra.mxu0 0.0
        %743 = vmatprep.subr.mxu0 0.0
        %744 = vmatpush1.msra.mxu0 0.0
        %745 = vmatprep.subr.mxu0 0.0
        %746 = vmatpush1.msra.mxu0 0.0
        %747 = vmatprep.subr.mxu0 0.0
        %748 = vmatpush1.msra.mxu0 0.0
        %749 = vmatprep.subr.mxu0 0.0
        %750 = vmatpush1.msra.mxu0 0.0
        %751 = vmatprep.subr.mxu0 0.0
        %752 = vmatpush1.msra.mxu0 0.0
        %753 = vmatprep.subr.mxu0 0.0
        %754 = vmatpush1.msra.mxu0 0.0
        %755 = vmatprep.subr.mxu0 0.0
        %756 = vmatpush1.msra.mxu0 0.0
        %757 = vmatprep.subr.mxu0 0.0
        %758 = vmatpush1.msra.mxu0 0.0
        %759 = vmatprep.subr.mxu0 0.0
        %760 = vmatpush1.msra.mxu0 0.0
        %761 = vmatprep.subr.mxu0 0.0
        %762 = vmatpush1.msra.mxu0 0.0
        %763 = vmatprep.subr.mxu0 0.0
        %v764 = vand.u32 %v322, 4294901760
        %765 = vmatpush1.msra.mxu0 %v764
        %766 = vmatprep.subr.mxu0 0.0
        %v767 = vand.u32 %v321, 4294901760
        %768 = vmatpush1.msra.mxu0 %v767
        %769 = vmatprep.subr.mxu0 0.0
        %v770 = vand.u32 %v320, 4294901760
        %771 = vmatpush1.msra.mxu0 %v770
        %772 = vmatprep.subr.mxu0 0.0
        %v773 = vand.u32 %v319, 4294901760
        %774 = vmatpush1.msra.mxu0 %v773
        %775 = vmatprep.subr.mxu0 0.0
        %776 = vmatpush2.msra.mxu0 0.0
        %777 = vmatprep.subr.mxu0 0.0
        %778 = vmatpush2.msra.mxu0 0.0
        %779 = vmatprep.subr.mxu0 0.0
        %780 = vmatpush2.msra.mxu0 0.0
        %781 = vmatprep.subr.mxu0 0.0
        %782 = vmatpush2.msra.mxu0 0.0
        %783 = vmatprep.subr.mxu0 0.0
        %784 = vmatpush2.msra.mxu0 0.0
        %785 = vmatprep.subr.mxu0 0.0
        %786 = vmatpush2.msra.mxu0 0.0
        %787 = vmatprep.subr.mxu0 0.0
        %788 = vmatpush2.msra.mxu0 0.0
        %789 = vmatprep.subr.mxu0 0.0
        %790 = vmatpush2.msra.mxu0 0.0
        %791 = vmatprep.subr.mxu0 0.0
        %792 = vmatpush2.msra.mxu0 0.0
        %793 = vmatprep.subr.mxu0 0.0
        %794 = vmatpush2.msra.mxu0 0.0
        %795 = vmatprep.subr.mxu0 0.0
        %796 = vmatpush2.msra.mxu0 0.0
        %797 = vmatprep.subr.mxu0 0.0
        %798 = vmatpush2.msra.mxu0 0.0
        %799 = vmatprep.subr.mxu0 0.0
        %800 = vmatpush2.msra.mxu0 0.0
        %801 = vmatprep.subr.mxu0 0.0
        %802 = vmatpush2.msra.mxu0 0.0
        %803 = vmatprep.subr.mxu0 0.0
        %804 = vmatpush2.msra.mxu0 0.0
        %805 = vmatprep.subr.mxu0 0.0
        %806 = vmatpush2.msra.mxu0 0.0
        %807 = vmatprep.mubr.f32.mxu0 0.0
        %v808 = vand.u32 %v327, 4294901760
        %809 = vmatmul.mubr.f32.gmra.mxu0 %v808
        %v810 = vpop.f32.mrf.mxu0
        %v811 = vadd.f32 %v736, %v810
        %v812 = vpop.f32.mrf.mxu0
        %813 = vdwg.mxu0
        %v814 = vmax.f32 %v811, 0.0
        %v815 = vld [vmem:[%s3] sm:$0xff]
        %v816 = vld [vmem:[%s3 + $0x8] sm:$0xff]
        %v817 = vld [vmem:[%s3 + $0x10] sm:$0xff]
        %v818 = vld [vmem:[%s3 + $0x18] sm:$0xff]
        %v819 = vld [vmem:[%s4] sm:$0xff]
        %v820 = vld [vmem:[%s4 + $0x8] sm:$0xff]
        %v821 = vld [vmem:[%s4 + $0x10] sm:$0xff]
        %v822 = vld [vmem:[%s4 + $0x18] sm:$0xff]
        %vm823 = vcmask 15360
        %v825 = vsel %vm823, %v815, 0
        %v828 = vsel %vm823, %v816, 0
        %v831 = vsel %vm823, %v817, 0
        %v834 = vsel %vm823, %v818, 0
        %vm836 = vcmask 1041408
        %v838 = vsel %vm836, %v814, 0
        %840 = vmatprep.subr.mxu0 0.0
        %841 = vmatpush1.msra.mxu0 0.0
        %842 = vmatprep.subr.mxu0 0.0
        %843 = vmatpush1.msra.mxu0 0.0
        %844 = vmatprep.subr.mxu0 0.0
        %845 = vmatpush1.msra.mxu0 0.0
        %846 = vmatprep.subr.mxu0 0.0
        %847 = vmatpush1.msra.mxu0 0.0
        %848 = vmatprep.subr.mxu0 0.0
        %849 = vmatpush1.msra.mxu0 0.0
        %850 = vmatprep.subr.mxu0 0.0
        %851 = vmatpush1.msra.mxu0 0.0
        %852 = vmatprep.subr.mxu0 0.0
        %853 = vmatpush1.msra.mxu0 0.0
        %854 = vmatprep.subr.mxu0 0.0
        %855 = vmatpush1.msra.mxu0 0.0
        %856 = vmatprep.subr.mxu0 0.0
        %857 = vmatpush1.msra.mxu0 0.0
        %858 = vmatprep.subr.mxu0 0.0
        %859 = vmatpush1.msra.mxu0 0.0
        %860 = vmatprep.subr.mxu0 0.0
        %861 = vmatpush1.msra.mxu0 0.0
        %862 = vmatprep.subr.mxu0 0.0
        %863 = vmatpush1.msra.mxu0 0.0
        %864 = vmatprep.subr.mxu0 0.0
        %865 = vmatpush1.msra.mxu0 0.0
        %866 = vmatprep.subr.mxu0 0.0
        %867 = vmatpush1.msra.mxu0 0.0
        %868 = vmatprep.subr.mxu0 0.0
        %869 = vmatpush1.msra.mxu0 0.0
        %870 = vmatprep.subr.mxu0 0.0
        %v871 = vand.u32 %v838, 4294901760
        %872 = vmatpush1.msra.mxu0 %v871
        %873 = vmatprep.subr.mxu0 0.0
        %874 = vmatpush2.msra.mxu0 0.0
        %875 = vmatprep.subr.mxu0 0.0
        %876 = vmatpush2.msra.mxu0 0.0
        %877 = vmatprep.subr.mxu0 0.0
        %878 = vmatpush2.msra.mxu0 0.0
        %879 = vmatprep.subr.mxu0 0.0
        %880 = vmatpush2.msra.mxu0 0.0
        %881 = vmatprep.subr.mxu0 0.0
        %882 = vmatpush2.msra.mxu0 0.0
        %883 = vmatprep.subr.mxu0 0.0
        %884 = vmatpush2.msra.mxu0 0.0
        %885 = vmatprep.subr.mxu0 0.0
        %886 = vmatpush2.msra.mxu0 0.0
        %887 = vmatprep.subr.mxu0 0.0
        %888 = vmatpush2.msra.mxu0 0.0
        %889 = vmatprep.subr.mxu0 0.0
        %890 = vmatpush2.msra.mxu0 0.0
        %891 = vmatprep.subr.mxu0 0.0
        %892 = vmatpush2.msra.mxu0 0.0
        %893 = vmatprep.subr.mxu0 0.0
        %894 = vmatpush2.msra.mxu0 0.0
        %895 = vmatprep.subr.mxu0 0.0
        %896 = vmatpush2.msra.mxu0 0.0
        %897 = vmatprep.subr.mxu0 0.0
        %898 = vmatpush2.msra.mxu0 0.0
        %899 = vmatprep.subr.mxu0 0.0
        %900 = vmatpush2.msra.mxu0 0.0
        %901 = vmatprep.subr.mxu0 0.0
        %902 = vmatpush2.msra.mxu0 0.0
        %903 = vmatprep.subr.mxu0 0.0
        %904 = vmatpush2.msra.mxu0 0.0
        %905 = vmatprep.mubr.f32.mxu0 0.0
        %v906 = vand.u32 %v825, 4294901760
        %v907 = vsub.f32 %v825, %v906
        %v908 = vand.u32 %v907, 4294901760
        %v909 = vsub.f32 %v907, %v908
        %v910 = vand.u32 %v909, 4294901760
        %911 = vmatmul.mubr.f32.gmra.mxu0 %v910
        %v912 = vpop.f32.mrf.mxu0
        %v913 = vadd.f32 %v819, %v912
        %v914 = vpop.f32.mrf.mxu0
        %915 = vmatprep.mubr.f32.mxu0 0.0
        %v916 = vand.u32 %v828, 4294901760
        %v917 = vsub.f32 %v828, %v916
        %v918 = vand.u32 %v917, 4294901760
        %v919 = vsub.f32 %v917, %v918
        %v920 = vand.u32 %v919, 4294901760
        %921 = vmatmul.mubr.f32.gmra.mxu0 %v920
        %v922 = vpop.f32.mrf.mxu0
        %v923 = vadd.f32 %v820, %v922
        %v924 = vpop.f32.mrf.mxu0
        %925 = vmatprep.mubr.f32.mxu0 0.0
        %v926 = vand.u32 %v831, 4294901760
        %v927 = vsub.f32 %v831, %v926
        %v928 = vand.u32 %v927, 4294901760
        %v929 = vsub.f32 %v927, %v928
        %v930 = vand.u32 %v929, 4294901760
        %931 = vmatmul.mubr.f32.gmra.mxu0 %v930
        %v932 = vpop.f32.mrf.mxu0
        %v933 = vadd.f32 %v821, %v932
        %v934 = vpop.f32.mrf.mxu0
        %935 = vmatprep.mubr.f32.mxu0 0.0
        %v936 = vand.u32 %v834, 4294901760
        %v937 = vsub.f32 %v834, %v936
        %v938 = vand.u32 %v937, 4294901760
        %v939 = vsub.f32 %v937, %v938
        %v940 = vand.u32 %v939, 4294901760
        %941 = vmatmul.mubr.f32.gmra.mxu0 %v940
        %v942 = vpop.f32.mrf.mxu0
        %v943 = vadd.f32 %v822, %v942
        %v944 = vpop.f32.mrf.mxu0
        %945 = vdwg.mxu0
        %946 = vmatprep.subr.mxu0 0.0
        %947 = vmatpush1.msra.mxu0 0.0
        %948 = vmatprep.subr.mxu0 0.0
        %949 = vmatpush1.msra.mxu0 0.0
        %950 = vmatprep.subr.mxu0 0.0
        %951 = vmatpush1.msra.mxu0 0.0
        %952 = vmatprep.subr.mxu0 0.0
        %953 = vmatpush1.msra.mxu0 0.0
        %954 = vmatprep.subr.mxu0 0.0
        %955 = vmatpush1.msra.mxu0 0.0
        %956 = vmatprep.subr.mxu0 0.0
        %957 = vmatpush1.msra.mxu0 0.0
        %958 = vmatprep.subr.mxu0 0.0
        %959 = vmatpush1.msra.mxu0 0.0
        %960 = vmatprep.subr.mxu0 0.0
        %961 = vmatpush1.msra.mxu0 0.0
        %962 = vmatprep.subr.mxu0 0.0
        %963 = vmatpush1.msra.mxu0 0.0
        %964 = vmatprep.subr.mxu0 0.0
        %965 = vmatpush1.msra.mxu0 0.0
        %966 = vmatprep.subr.mxu0 0.0
        %967 = vmatpush1.msra.mxu0 0.0
        %968 = vmatprep.subr.mxu0 0.0
        %969 = vmatpush1.msra.mxu0 0.0
        %970 = vmatprep.subr.mxu0 0.0
        %971 = vmatpush1.msra.mxu0 0.0
        %972 = vmatprep.subr.mxu0 0.0
        %973 = vmatpush1.msra.mxu0 0.0
        %974 = vmatprep.subr.mxu0 0.0
        %975 = vmatpush1.msra.mxu0 0.0
        %976 = vmatprep.subr.mxu0 0.0
        %v977 = vand.u32 %v838, 4294901760
        %v978 = vsub.f32 %v838, %v977
        %v979 = vand.u32 %v978, 4294901760
        %v980 = vsub.f32 %v978, %v979
        %v981 = vand.u32 %v980, 4294901760
        %982 = vmatpush1.msra.mxu0 %v981
        %983 = vmatprep.subr.mxu0 0.0
        %984 = vmatpush2.msra.mxu0 0.0
        %985 = vmatprep.subr.mxu0 0.0
        %986 = vmatpush2.msra.mxu0 0.0
        %987 = vmatprep.subr.mxu0 0.0
        %988 = vmatpush2.msra.mxu0 0.0
        %989 = vmatprep.subr.mxu0 0.0
        %990 = vmatpush2.msra.mxu0 0.0
        %991 = vmatprep.subr.mxu0 0.0
        %992 = vmatpush2.msra.mxu0 0.0
        %993 = vmatprep.subr.mxu0 0.0
        %994 = vmatpush2.msra.mxu0 0.0
        %995 = vmatprep.subr.mxu0 0.0
        %996 = vmatpush2.msra.mxu0 0.0
        %997 = vmatprep.subr.mxu0 0.0
        %998 = vmatpush2.msra.mxu0 0.0
        %999 = vmatprep.subr.mxu0 0.0
        %1000 = vmatpush2.msra.mxu0 0.0
        %1001 = vmatprep.subr.mxu0 0.0
        %1002 = vmatpush2.msra.mxu0 0.0
        %1003 = vmatprep.subr.mxu0 0.0
        %1004 = vmatpush2.msra.mxu0 0.0
        %1005 = vmatprep.subr.mxu0 0.0
        %1006 = vmatpush2.msra.mxu0 0.0
        %1007 = vmatprep.subr.mxu0 0.0
        %1008 = vmatpush2.msra.mxu0 0.0
        %1009 = vmatprep.subr.mxu0 0.0
        %1010 = vmatpush2.msra.mxu0 0.0
        %1011 = vmatprep.subr.mxu0 0.0
        %1012 = vmatpush2.msra.mxu0 0.0
        %1013 = vmatprep.subr.mxu0 0.0
        %1014 = vmatpush2.msra.mxu0 0.0
        %1015 = vmatprep.mubr.f32.mxu0 0.0
        %v1016 = vand.u32 %v825, 4294901760
        %1017 = vmatmul.mubr.f32.gmra.mxu0 %v1016
        %v1018 = vpop.f32.mrf.mxu0
        %v1019 = vadd.f32 %v913, %v1018
        %v1020 = vpop.f32.mrf.mxu0
        %1021 = vmatprep.mubr.f32.mxu0 0.0
        %v1022 = vand.u32 %v828, 4294901760
        %1023 = vmatmul.mubr.f32.gmra.mxu0 %v1022
        %v1024 = vpop.f32.mrf.mxu0
        %v1025 = vadd.f32 %v923, %v1024
        %v1026 = vpop.f32.mrf.mxu0
        %1027 = vmatprep.mubr.f32.mxu0 0.0
        %v1028 = vand.u32 %v831, 4294901760
        %1029 = vmatmul.mubr.f32.gmra.mxu0 %v1028
        %v1030 = vpop.f32.mrf.mxu0
        %v1031 = vadd.f32 %v933, %v1030
        %v1032 = vpop.f32.mrf.mxu0
        %1033 = vmatprep.mubr.f32.mxu0 0.0
        %v1034 = vand.u32 %v834, 4294901760
        %1035 = vmatmul.mubr.f32.gmra.mxu0 %v1034
        %v1036 = vpop.f32.mrf.mxu0
        %v1037 = vadd.f32 %v943, %v1036
        %v1038 = vpop.f32.mrf.mxu0
        %1039 = vdwg.mxu0
        %1040 = vmatprep.subr.mxu0 0.0
        %1041 = vmatpush1.msra.mxu0 0.0
        %1042 = vmatprep.subr.mxu0 0.0
        %1043 = vmatpush1.msra.mxu0 0.0
        %1044 = vmatprep.subr.mxu0 0.0
        %1045 = vmatpush1.msra.mxu0 0.0
        %1046 = vmatprep.subr.mxu0 0.0
        %1047 = vmatpush1.msra.mxu0 0.0
        %1048 = vmatprep.subr.mxu0 0.0
        %1049 = vmatpush1.msra.mxu0 0.0
        %1050 = vmatprep.subr.mxu0 0.0
        %1051 = vmatpush1.msra.mxu0 0.0
        %1052 = vmatprep.subr.mxu0 0.0
        %1053 = vmatpush1.msra.mxu0 0.0
        %1054 = vmatprep.subr.mxu0 0.0
        %1055 = vmatpush1.msra.mxu0 0.0
        %1056 = vmatprep.subr.mxu0 0.0
        %1057 = vmatpush1.msra.mxu0 0.0
        %1058 = vmatprep.subr.mxu0 0.0
        %1059 = vmatpush1.msra.mxu0 0.0
        %1060 = vmatprep.subr.mxu0 0.0
        %1061 = vmatpush1.msra.mxu0 0.0
        %1062 = vmatprep.subr.mxu0 0.0
        %1063 = vmatpush1.msra.mxu0 0.0
        %1064 = vmatprep.subr.mxu0 0.0
        %1065 = vmatpush1.msra.mxu0 0.0
        %1066 = vmatprep.subr.mxu0 0.0
        %1067 = vmatpush1.msra.mxu0 0.0
        %1068 = vmatprep.subr.mxu0 0.0
        %1069 = vmatpush1.msra.mxu0 0.0
        %1070 = vmatprep.subr.mxu0 0.0
        %v1071 = vand.u32 %v838, 4294901760
        %v1072 = vsub.f32 %v838, %v1071
        %1073 = vmatpush1.msra.mxu0 %v1072
        %1074 = vmatprep.subr.mxu0 0.0
        %1075 = vmatpush2.msra.mxu0 0.0
        %1076 = vmatprep.subr.mxu0 0.0
        %1077 = vmatpush2.msra.mxu0 0.0
        %1078 = vmatprep.subr.mxu0 0.0
        %1079 = vmatpush2.msra.mxu0 0.0
        %1080 = vmatprep.subr.mxu0 0.0
        %1081 = vmatpush2.msra.mxu0 0.0
        %1082 = vmatprep.subr.mxu0 0.0
        %1083 = vmatpush2.msra.mxu0 0.0
        %1084 = vmatprep.subr.mxu0 0.0
        %1085 = vmatpush2.msra.mxu0 0.0
        %1086 = vmatprep.subr.mxu0 0.0
        %1087 = vmatpush2.msra.mxu0 0.0
        %1088 = vmatprep.subr.mxu0 0.0
        %1089 = vmatpush2.msra.mxu0 0.0
        %1090 = vmatprep.subr.mxu0 0.0
        %1091 = vmatpush2.msra.mxu0 0.0
        %1092 = vmatprep.subr.mxu0 0.0
        %1093 = vmatpush2.msra.mxu0 0.0
        %1094 = vmatprep.subr.mxu0 0.0
        %1095 = vmatpush2.msra.mxu0 0.0
        %1096 = vmatprep.subr.mxu0 0.0
        %1097 = vmatpush2.msra.mxu0 0.0
        %1098 = vmatprep.subr.mxu0 0.0
        %1099 = vmatpush2.msra.mxu0 0.0
        %1100 = vmatprep.subr.mxu0 0.0
        %1101 = vmatpush2.msra.mxu0 0.0
        %1102 = vmatprep.subr.mxu0 0.0
        %1103 = vmatpush2.msra.mxu0 0.0
        %1104 = vmatprep.subr.mxu0 0.0
        %1105 = vmatpush2.msra.mxu0 0.0
        %1106 = vmatprep.mubr.f32.mxu0 0.0
        %v1107 = vand.u32 %v825, 4294901760
        %v1108 = vsub.f32 %v825, %v1107
        %1109 = vmatmul.mubr.f32.gmra.mxu0 %v1108
        %v1110 = vpop.f32.mrf.mxu0
        %v1111 = vadd.f32 %v1019, %v1110
        %v1112 = vpop.f32.mrf.mxu0
        %1113 = vmatprep.mubr.f32.mxu0 0.0
        %v1114 = vand.u32 %v828, 4294901760
        %v1115 = vsub.f32 %v828, %v1114
        %1116 = vmatmul.mubr.f32.gmra.mxu0 %v1115
        %v1117 = vpop.f32.mrf.mxu0
        %v1118 = vadd.f32 %v1025, %v1117
        %v1119 = vpop.f32.mrf.mxu0
        %1120 = vmatprep.mubr.f32.mxu0 0.0
        %v1121 = vand.u32 %v831, 4294901760
        %v1122 = vsub.f32 %v831, %v1121
        %1123 = vmatmul.mubr.f32.gmra.mxu0 %v1122
        %v1124 = vpop.f32.mrf.mxu0
        %v1125 = vadd.f32 %v1031, %v1124
        %v1126 = vpop.f32.mrf.mxu0
        %1127 = vmatprep.mubr.f32.mxu0 0.0
        %v1128 = vand.u32 %v834, 4294901760
        %v1129 = vsub.f32 %v834, %v1128
        %1130 = vmatmul.mubr.f32.gmra.mxu0 %v1129
        %v1131 = vpop.f32.mrf.mxu0
        %v1132 = vadd.f32 %v1037, %v1131
        %v1133 = vpop.f32.mrf.mxu0
        %1134 = vdwg.mxu0
        %1135 = vmatprep.subr.mxu0 0.0
        %1136 = vmatpush1.msra.mxu0 0.0
        %1137 = vmatprep.subr.mxu0 0.0
        %1138 = vmatpush1.msra.mxu0 0.0
        %1139 = vmatprep.subr.mxu0 0.0
        %1140 = vmatpush1.msra.mxu0 0.0
        %1141 = vmatprep.subr.mxu0 0.0
        %1142 = vmatpush1.msra.mxu0 0.0
        %1143 = vmatprep.subr.mxu0 0.0
        %1144 = vmatpush1.msra.mxu0 0.0
        %1145 = vmatprep.subr.mxu0 0.0
        %1146 = vmatpush1.msra.mxu0 0.0
        %1147 = vmatprep.subr.mxu0 0.0
        %1148 = vmatpush1.msra.mxu0 0.0
        %1149 = vmatprep.subr.mxu0 0.0
        %1150 = vmatpush1.msra.mxu0 0.0
        %1151 = vmatprep.subr.mxu0 0.0
        %1152 = vmatpush1.msra.mxu0 0.0
        %1153 = vmatprep.subr.mxu0 0.0
        %1154 = vmatpush1.msra.mxu0 0.0
        %1155 = vmatprep.subr.mxu0 0.0
        %1156 = vmatpush1.msra.mxu0 0.0
        %1157 = vmatprep.subr.mxu0 0.0
        %1158 = vmatpush1.msra.mxu0 0.0
        %1159 = vmatprep.subr.mxu0 0.0
        %1160 = vmatpush1.msra.mxu0 0.0
        %1161 = vmatprep.subr.mxu0 0.0
        %1162 = vmatpush1.msra.mxu0 0.0
        %1163 = vmatprep.subr.mxu0 0.0
        %1164 = vmatpush1.msra.mxu0 0.0
        %1165 = vmatprep.subr.mxu0 0.0
        %v1166 = vand.u32 %v838, 4294901760
        %1167 = vmatpush1.msra.mxu0 %v1166
        %1168 = vmatprep.subr.mxu0 0.0
        %1169 = vmatpush2.msra.mxu0 0.0
        %1170 = vmatprep.subr.mxu0 0.0
        %1171 = vmatpush2.msra.mxu0 0.0
        %1172 = vmatprep.subr.mxu0 0.0
        %1173 = vmatpush2.msra.mxu0 0.0
        %1174 = vmatprep.subr.mxu0 0.0
        %1175 = vmatpush2.msra.mxu0 0.0
        %1176 = vmatprep.subr.mxu0 0.0
        %1177 = vmatpush2.msra.mxu0 0.0
        %1178 = vmatprep.subr.mxu0 0.0
        %1179 = vmatpush2.msra.mxu0 0.0
        %1180 = vmatprep.subr.mxu0 0.0
        %1181 = vmatpush2.msra.mxu0 0.0
        %1182 = vmatprep.subr.mxu0 0.0
        %1183 = vmatpush2.msra.mxu0 0.0
        %1184 = vmatprep.subr.mxu0 0.0
        %1185 = vmatpush2.msra.mxu0 0.0
        %1186 = vmatprep.subr.mxu0 0.0
        %1187 = vmatpush2.msra.mxu0 0.0
        %1188 = vmatprep.subr.mxu0 0.0
        %1189 = vmatpush2.msra.mxu0 0.0
        %1190 = vmatprep.subr.mxu0 0.0
        %1191 = vmatpush2.msra.mxu0 0.0
        %1192 = vmatprep.subr.mxu0 0.0
        %1193 = vmatpush2.msra.mxu0 0.0
        %1194 = vmatprep.subr.mxu0 0.0
        %1195 = vmatpush2.msra.mxu0 0.0
        %1196 = vmatprep.subr.mxu0 0.0
        %1197 = vmatpush2.msra.mxu0 0.0
        %1198 = vmatprep.subr.mxu0 0.0
        %1199 = vmatpush2.msra.mxu0 0.0
        %1200 = vmatprep.mubr.f32.mxu0 0.0
        %v1201 = vand.u32 %v825, 4294901760
        %v1202 = vsub.f32 %v825, %v1201
        %v1203 = vand.u32 %v1202, 4294901760
        %1204 = vmatmul.mubr.f32.gmra.mxu0 %v1203
        %v1205 = vpop.f32.mrf.mxu0
        %v1206 = vadd.f32 %v1111, %v1205
        %v1207 = vpop.f32.mrf.mxu0
        %1208 = vmatprep.mubr.f32.mxu0 0.0
        %v1209 = vand.u32 %v828, 4294901760
        %v1210 = vsub.f32 %v828, %v1209
        %v1211 = vand.u32 %v1210, 4294901760
        %1212 = vmatmul.mubr.f32.gmra.mxu0 %v1211
        %v1213 = vpop.f32.mrf.mxu0
        %v1214 = vadd.f32 %v1118, %v1213
        %v1215 = vpop.f32.mrf.mxu0
        %1216 = vmatprep.mubr.f32.mxu0 0.0
        %v1217 = vand.u32 %v831, 4294901760
        %v1218 = vsub.f32 %v831, %v1217
        %v1219 = vand.u32 %v1218, 4294901760
        %1220 = vmatmul.mubr.f32.gmra.mxu0 %v1219
        %v1221 = vpop.f32.mrf.mxu0
        %v1222 = vadd.f32 %v1125, %v1221
        %v1223 = vpop.f32.mrf.mxu0
        %1224 = vmatprep.mubr.f32.mxu0 0.0
        %v1225 = vand.u32 %v834, 4294901760
        %v1226 = vsub.f32 %v834, %v1225
        %v1227 = vand.u32 %v1226, 4294901760
        %1228 = vmatmul.mubr.f32.gmra.mxu0 %v1227
        %v1229 = vpop.f32.mrf.mxu0
        %v1230 = vadd.f32 %v1132, %v1229
        %v1231 = vpop.f32.mrf.mxu0
        %1232 = vdwg.mxu0
        %1233 = vmatprep.subr.mxu0 0.0
        %1234 = vmatpush1.msra.mxu0 0.0
        %1235 = vmatprep.subr.mxu0 0.0
        %1236 = vmatpush1.msra.mxu0 0.0
        %1237 = vmatprep.subr.mxu0 0.0
        %1238 = vmatpush1.msra.mxu0 0.0
        %1239 = vmatprep.subr.mxu0 0.0
        %1240 = vmatpush1.msra.mxu0 0.0
        %1241 = vmatprep.subr.mxu0 0.0
        %1242 = vmatpush1.msra.mxu0 0.0
        %1243 = vmatprep.subr.mxu0 0.0
        %1244 = vmatpush1.msra.mxu0 0.0
        %1245 = vmatprep.subr.mxu0 0.0
        %1246 = vmatpush1.msra.mxu0 0.0
        %1247 = vmatprep.subr.mxu0 0.0
        %1248 = vmatpush1.msra.mxu0 0.0
        %1249 = vmatprep.subr.mxu0 0.0
        %1250 = vmatpush1.msra.mxu0 0.0
        %1251 = vmatprep.subr.mxu0 0.0
        %1252 = vmatpush1.msra.mxu0 0.0
        %1253 = vmatprep.subr.mxu0 0.0
        %1254 = vmatpush1.msra.mxu0 0.0
        %1255 = vmatprep.subr.mxu0 0.0
        %1256 = vmatpush1.msra.mxu0 0.0
        %1257 = vmatprep.subr.mxu0 0.0
        %1258 = vmatpush1.msra.mxu0 0.0
        %1259 = vmatprep.subr.mxu0 0.0
        %1260 = vmatpush1.msra.mxu0 0.0
        %1261 = vmatprep.subr.mxu0 0.0
        %1262 = vmatpush1.msra.mxu0 0.0
        %1263 = vmatprep.subr.mxu0 0.0
        %v1264 = vand.u32 %v838, 4294901760
        %v1265 = vsub.f32 %v838, %v1264
        %v1266 = vand.u32 %v1265, 4294901760
        %1267 = vmatpush1.msra.mxu0 %v1266
        %1268 = vmatprep.subr.mxu0 0.0
        %1269 = vmatpush2.msra.mxu0 0.0
        %1270 = vmatprep.subr.mxu0 0.0
        %1271 = vmatpush2.msra.mxu0 0.0
        %1272 = vmatprep.subr.mxu0 0.0
        %1273 = vmatpush2.msra.mxu0 0.0
        %1274 = vmatprep.subr.mxu0 0.0
        %1275 = vmatpush2.msra.mxu0 0.0
        %1276 = vmatprep.subr.mxu0 0.0
        %1277 = vmatpush2.msra.mxu0 0.0
        %1278 = vmatprep.subr.mxu0 0.0
        %1279 = vmatpush2.msra.mxu0 0.0
        %1280 = vmatprep.subr.mxu0 0.0
        %1281 = vmatpush2.msra.mxu0 0.0
        %1282 = vmatprep.subr.mxu0 0.0
        %1283 = vmatpush2.msra.mxu0 0.0
        %1284 = vmatprep.subr.mxu0 0.0
        %1285 = vmatpush2.msra.mxu0 0.0
        %1286 = vmatprep.subr.mxu0 0.0
        %1287 = vmatpush2.msra.mxu0 0.0
        %1288 = vmatprep.subr.mxu0 0.0
        %1289 = vmatpush2.msra.mxu0 0.0
        %1290 = vmatprep.subr.mxu0 0.0
        %1291 = vmatpush2.msra.mxu0 0.0
        %1292 = vmatprep.subr.mxu0 0.0
        %1293 = vmatpush2.msra.mxu0 0.0
        %1294 = vmatprep.subr.mxu0 0.0
        %1295 = vmatpush2.msra.mxu0 0.0
        %1296 = vmatprep.subr.mxu0 0.0
        %1297 = vmatpush2.msra.mxu0 0.0
        %1298 = vmatprep.subr.mxu0 0.0
        %1299 = vmatpush2.msra.mxu0 0.0
        %1300 = vmatprep.mubr.f32.mxu0 0.0
        %v1301 = vand.u32 %v825, 4294901760
        %1302 = vmatmul.mubr.f32.gmra.mxu0 %v1301
        %v1303 = vpop.f32.mrf.mxu0
        %v1304 = vadd.f32 %v1206, %v1303
        %v1305 = vpop.f32.mrf.mxu0
        %1306 = vmatprep.mubr.f32.mxu0 0.0
        %v1307 = vand.u32 %v828, 4294901760
        %1308 = vmatmul.mubr.f32.gmra.mxu0 %v1307
        %v1309 = vpop.f32.mrf.mxu0
        %v1310 = vadd.f32 %v1214, %v1309
        %v1311 = vpop.f32.mrf.mxu0
        %1312 = vmatprep.mubr.f32.mxu0 0.0
        %v1313 = vand.u32 %v831, 4294901760
        %1314 = vmatmul.mubr.f32.gmra.mxu0 %v1313
        %v1315 = vpop.f32.mrf.mxu0
        %v1316 = vadd.f32 %v1222, %v1315
        %v1317 = vpop.f32.mrf.mxu0
        %1318 = vmatprep.mubr.f32.mxu0 0.0
        %v1319 = vand.u32 %v834, 4294901760
        %1320 = vmatmul.mubr.f32.gmra.mxu0 %v1319
        %v1321 = vpop.f32.mrf.mxu0
        %v1322 = vadd.f32 %v1230, %v1321
        %v1323 = vpop.f32.mrf.mxu0
        %1324 = vdwg.mxu0
        %1325 = vmatprep.subr.mxu0 0.0
        %1326 = vmatpush1.msra.mxu0 0.0
        %1327 = vmatprep.subr.mxu0 0.0
        %1328 = vmatpush1.msra.mxu0 0.0
        %1329 = vmatprep.subr.mxu0 0.0
        %1330 = vmatpush1.msra.mxu0 0.0
        %1331 = vmatprep.subr.mxu0 0.0
        %1332 = vmatpush1.msra.mxu0 0.0
        %1333 = vmatprep.subr.mxu0 0.0
        %1334 = vmatpush1.msra.mxu0 0.0
        %1335 = vmatprep.subr.mxu0 0.0
        %1336 = vmatpush1.msra.mxu0 0.0
        %1337 = vmatprep.subr.mxu0 0.0
        %1338 = vmatpush1.msra.mxu0 0.0
        %1339 = vmatprep.subr.mxu0 0.0
        %1340 = vmatpush1.msra.mxu0 0.0
        %1341 = vmatprep.subr.mxu0 0.0
        %1342 = vmatpush1.msra.mxu0 0.0
        %1343 = vmatprep.subr.mxu0 0.0
        %1344 = vmatpush1.msra.mxu0 0.0
        %1345 = vmatprep.subr.mxu0 0.0
        %1346 = vmatpush1.msra.mxu0 0.0
        %1347 = vmatprep.subr.mxu0 0.0
        %1348 = vmatpush1.msra.mxu0 0.0
        %1349 = vmatprep.subr.mxu0 0.0
        %1350 = vmatpush1.msra.mxu0 0.0
        %1351 = vmatprep.subr.mxu0 0.0
        %1352 = vmatpush1.msra.mxu0 0.0
        %1353 = vmatprep.subr.mxu0 0.0
        %1354 = vmatpush1.msra.mxu0 0.0
        %1355 = vmatprep.subr.mxu0 0.0
        %v1356 = vand.u32 %v838, 4294901760
        %1357 = vmatpush1.msra.mxu0 %v1356
        %1358 = vmatprep.subr.mxu0 0.0
        %1359 = vmatpush2.msra.mxu0 0.0
        %1360 = vmatprep.subr.mxu0 0.0
        %1361 = vmatpush2.msra.mxu0 0.0
        %1362 = vmatprep.subr.mxu0 0.0
        %1363 = vmatpush2.msra.mxu0 0.0
        %1364 = vmatprep.subr.mxu0 0.0
        %1365 = vmatpush2.msra.mxu0 0.0
        %1366 = vmatprep.subr.mxu0 0.0
        %1367 = vmatpush2.msra.mxu0 0.0
        %1368 = vmatprep.subr.mxu0 0.0
        %1369 = vmatpush2.msra.mxu0 0.0
        %1370 = vmatprep.subr.mxu0 0.0
        %1371 = vmatpush2.msra.mxu0 0.0
        %1372 = vmatprep.subr.mxu0 0.0
        %1373 = vmatpush2.msra.mxu0 0.0
        %1374 = vmatprep.subr.mxu0 0.0
        %1375 = vmatpush2.msra.mxu0 0.0
        %1376 = vmatprep.subr.mxu0 0.0
        %1377 = vmatpush2.msra.mxu0 0.0
        %1378 = vmatprep.subr.mxu0 0.0
        %1379 = vmatpush2.msra.mxu0 0.0
        %1380 = vmatprep.subr.mxu0 0.0
        %1381 = vmatpush2.msra.mxu0 0.0
        %1382 = vmatprep.subr.mxu0 0.0
        %1383 = vmatpush2.msra.mxu0 0.0
        %1384 = vmatprep.subr.mxu0 0.0
        %1385 = vmatpush2.msra.mxu0 0.0
        %1386 = vmatprep.subr.mxu0 0.0
        %1387 = vmatpush2.msra.mxu0 0.0
        %1388 = vmatprep.subr.mxu0 0.0
        %1389 = vmatpush2.msra.mxu0 0.0
        %1390 = vmatprep.mubr.f32.mxu0 0.0
        %v1391 = vand.u32 %v825, 4294901760
        %1392 = vmatmul.mubr.f32.gmra.mxu0 %v1391
        %v1393 = vpop.f32.mrf.mxu0
        %v1394 = vadd.f32 %v1304, %v1393
        %v1395 = vpop.f32.mrf.mxu0
        %1396 = vmatprep.mubr.f32.mxu0 0.0
        %v1397 = vand.u32 %v828, 4294901760
        %1398 = vmatmul.mubr.f32.gmra.mxu0 %v1397
        %v1399 = vpop.f32.mrf.mxu0
        %v1400 = vadd.f32 %v1310, %v1399
        %v1401 = vpop.f32.mrf.mxu0
        %1402 = vmatprep.mubr.f32.mxu0 0.0
        %v1403 = vand.u32 %v831, 4294901760
        %1404 = vmatmul.mubr.f32.gmra.mxu0 %v1403
        %v1405 = vpop.f32.mrf.mxu0
        %v1406 = vadd.f32 %v1316, %v1405
        %v1407 = vpop.f32.mrf.mxu0
        %1408 = vmatprep.mubr.f32.mxu0 0.0
        %v1409 = vand.u32 %v834, 4294901760
        %1410 = vmatmul.mubr.f32.gmra.mxu0 %v1409
        %v1411 = vpop.f32.mrf.mxu0
        %v1412 = vadd.f32 %v1322, %v1411
        %v1413 = vpop.f32.mrf.mxu0
        %1414 = vdwg.mxu0
        %v1415 = vsub.f32 0.0, %v1394
        %v1416 = vsub.f32 0.0, %v1400
        %v1417 = vsub.f32 0.0, %v1406
        %v1418 = vsub.f32 0.0, %v1412
        %v1419 = vmul.f32 %v1415, 1.442695
        %v1420 = vpow.pop %v1419
        %v1421 = vmul.f32 %v1416, 1.442695
        %v1422 = vpow.pop %v1421
        %v1423 = vmul.f32 %v1417, 1.442695
        %v1424 = vpow.pop %v1423
        %v1425 = vmul.f32 %v1418, 1.442695
        %v1426 = vpow.pop %v1425
        %v1427 = vadd.f32 %v1420, 1.0
        %v1428 = vadd.f32 %v1422, 1.0
        %v1429 = vadd.f32 %v1424, 1.0
        %v1430 = vadd.f32 %v1426, 1.0
        %v1431 = vrcp.pop %v1427
        %v1432 = vmul.f32 1.0, %v1431
        %v1433 = vrcp.pop %v1428
        %v1434 = vmul.f32 1.0, %v1433
        %v1435 = vrcp.pop %v1429
        %v1436 = vmul.f32 1.0, %v1435
        %v1437 = vrcp.pop %v1430
        %v1438 = vmul.f32 1.0, %v1437
        %v1439 = vld [vmem:[%s5] sm:$0x1]
        %v1440 = vld [vmem:[#allocation2] sm:$0x1]
        %1442 = vset.pattern.permute.xlu0 0
        %1443 = vperm.xlu0 %1442, %v1440
        %v1444 = vpop.permute.xlu0 %1443
        %v1446 = vlaneseq
        %v1447 = vshrl.u32 %v1446, 7
        %v1448 = vsub.s32 0, %v1447
        %v1449 = vrot.slane %v1444, %v1448
        %v1451 = vsel %vm325, %v1439, 0
        %1453 = vmatprep.subr.mxu0 0.0
        %1454 = vmatpush1.msra.mxu0 0.0
        %1455 = vmatprep.subr.mxu0 0.0
        %1456 = vmatpush1.msra.mxu0 0.0
        %1457 = vmatprep.subr.mxu0 0.0
        %1458 = vmatpush1.msra.mxu0 0.0
        %1459 = vmatprep.subr.mxu0 0.0
        %1460 = vmatpush1.msra.mxu0 0.0
        %1461 = vmatprep.subr.mxu0 0.0
        %1462 = vmatpush1.msra.mxu0 0.0
        %1463 = vmatprep.subr.mxu0 0.0
        %1464 = vmatpush1.msra.mxu0 0.0
        %1465 = vmatprep.subr.mxu0 0.0
        %1466 = vmatpush1.msra.mxu0 0.0
        %1467 = vmatprep.subr.mxu0 0.0
        %1468 = vmatpush1.msra.mxu0 0.0
        %1469 = vmatprep.subr.mxu0 0.0
        %1470 = vmatpush1.msra.mxu0 0.0
        %1471 = vmatprep.subr.mxu0 0.0
        %1472 = vmatpush1.msra.mxu0 0.0
        %1473 = vmatprep.subr.mxu0 0.0
        %1474 = vmatpush1.msra.mxu0 0.0
        %1475 = vmatprep.subr.mxu0 0.0
        %1476 = vmatpush1.msra.mxu0 0.0
        %v1477 = vand.u32 %v306, 4294901760
        %1478 = vmatprep.subr.mxu0 %v1477
        %v1479 = vand.u32 %v305, 4294901760
        %1480 = vmatpush1.msra.mxu0 %v1479
        %v1481 = vand.u32 %v304, 4294901760
        %1482 = vmatprep.subr.mxu0 %v1481
        %v1483 = vand.u32 %v303, 4294901760
        %1484 = vmatpush1.msra.mxu0 %v1483
        %v1485 = vand.u32 %v302, 4294901760
        %1486 = vmatprep.subr.mxu0 %v1485
        %v1487 = vand.u32 %v301, 4294901760
        %1488 = vmatpush1.msra.mxu0 %v1487
        %v1489 = vand.u32 %v300, 4294901760
        %1490 = vmatprep.subr.mxu0 %v1489
        %v1491 = vand.u32 %v299, 4294901760
        %1492 = vmatpush1.msra.mxu0 %v1491
        %1493 = vmatprep.subr.mxu0 0.0
        %1494 = vmatpush2.msra.mxu0 0.0
        %1495 = vmatprep.subr.mxu0 0.0
        %1496 = vmatpush2.msra.mxu0 0.0
        %1497 = vmatprep.subr.mxu0 0.0
        %1498 = vmatpush2.msra.mxu0 0.0
        %1499 = vmatprep.subr.mxu0 0.0
        %1500 = vmatpush2.msra.mxu0 0.0
        %1501 = vmatprep.subr.mxu0 0.0
        %1502 = vmatpush2.msra.mxu0 0.0
        %1503 = vmatprep.subr.mxu0 0.0
        %1504 = vmatpush2.msra.mxu0 0.0
        %1505 = vmatprep.subr.mxu0 0.0
        %1506 = vmatpush2.msra.mxu0 0.0
        %1507 = vmatprep.subr.mxu0 0.0
        %1508 = vmatpush2.msra.mxu0 0.0
        %1509 = vmatprep.subr.mxu0 0.0
        %1510 = vmatpush2.msra.mxu0 0.0
        %1511 = vmatprep.subr.mxu0 0.0
        %1512 = vmatpush2.msra.mxu0 0.0
        %1513 = vmatprep.subr.mxu0 0.0
        %1514 = vmatpush2.msra.mxu0 0.0
        %1515 = vmatprep.subr.mxu0 0.0
        %1516 = vmatpush2.msra.mxu0 0.0
        %1517 = vmatprep.subr.mxu0 0.0
        %1518 = vmatpush2.msra.mxu0 0.0
        %1519 = vmatprep.subr.mxu0 0.0
        %1520 = vmatpush2.msra.mxu0 0.0
        %1521 = vmatprep.subr.mxu0 0.0
        %1522 = vmatpush2.msra.mxu0 0.0
        %1523 = vmatprep.subr.mxu0 0.0
        %1524 = vmatpush2.msra.mxu0 0.0
        %1525 = vmatprep.mubr.f32.mxu0 0.0
        %v1526 = vand.u32 %v1451, 4294901760
        %v1527 = vsub.f32 %v1451, %v1526
        %v1528 = vand.u32 %v1527, 4294901760
        %v1529 = vsub.f32 %v1527, %v1528
        %v1530 = vand.u32 %v1529, 4294901760
        %1531 = vmatmul.mubr.f32.gmra.mxu0 %v1530
        %v1532 = vpop.f32.mrf.mxu0
        %v1533 = vadd.f32 %v1449, %v1532
        %v1534 = vpop.f32.mrf.mxu0
        %v1535 = vadd.f32 %v1449, %v1534
        %1536 = vdwg.mxu0
        %1537 = vmatprep.subr.mxu0 0.0
        %1538 = vmatpush1.msra.mxu0 0.0
        %1539 = vmatprep.subr.mxu0 0.0
        %1540 = vmatpush1.msra.mxu0 0.0
        %1541 = vmatprep.subr.mxu0 0.0
        %1542 = vmatpush1.msra.mxu0 0.0
        %1543 = vmatprep.subr.mxu0 0.0
        %1544 = vmatpush1.msra.mxu0 0.0
        %1545 = vmatprep.subr.mxu0 0.0
        %1546 = vmatpush1.msra.mxu0 0.0
        %1547 = vmatprep.subr.mxu0 0.0
        %1548 = vmatpush1.msra.mxu0 0.0
        %1549 = vmatprep.subr.mxu0 0.0
        %1550 = vmatpush1.msra.mxu0 0.0
        %1551 = vmatprep.subr.mxu0 0.0
        %1552 = vmatpush1.msra.mxu0 0.0
        %1553 = vmatprep.subr.mxu0 0.0
        %1554 = vmatpush1.msra.mxu0 0.0
        %1555 = vmatprep.subr.mxu0 0.0
        %1556 = vmatpush1.msra.mxu0 0.0
        %1557 = vmatprep.subr.mxu0 0.0
        %1558 = vmatpush1.msra.mxu0 0.0
        %1559 = vmatprep.subr.mxu0 0.0
        %1560 = vmatpush1.msra.mxu0 0.0
        %v1561 = vand.u32 %v306, 4294901760
        %v1562 = vsub.f32 %v306, %v1561
        %v1563 = vand.u32 %v1562, 4294901760
        %v1564 = vsub.f32 %v1562, %v1563
        %v1565 = vand.u32 %v1564, 4294901760
        %1566 = vmatprep.subr.mxu0 %v1565
        %v1567 = vand.u32 %v305, 4294901760
        %v1568 = vsub.f32 %v305, %v1567
        %v1569 = vand.u32 %v1568, 4294901760
        %v1570 = vsub.f32 %v1568, %v1569
        %v1571 = vand.u32 %v1570, 4294901760
        %1572 = vmatpush1.msra.mxu0 %v1571
        %v1573 = vand.u32 %v304, 4294901760
        %v1574 = vsub.f32 %v304, %v1573
        %v1575 = vand.u32 %v1574, 4294901760
        %v1576 = vsub.f32 %v1574, %v1575
        %v1577 = vand.u32 %v1576, 4294901760
        %1578 = vmatprep.subr.mxu0 %v1577
        %v1579 = vand.u32 %v303, 4294901760
        %v1580 = vsub.f32 %v303, %v1579
        %v1581 = vand.u32 %v1580, 4294901760
        %v1582 = vsub.f32 %v1580, %v1581
        %v1583 = vand.u32 %v1582, 4294901760
        %1584 = vmatpush1.msra.mxu0 %v1583
        %v1585 = vand.u32 %v302, 4294901760
        %v1586 = vsub.f32 %v302, %v1585
        %v1587 = vand.u32 %v1586, 4294901760
        %v1588 = vsub.f32 %v1586, %v1587
        %v1589 = vand.u32 %v1588, 4294901760
        %1590 = vmatprep.subr.mxu0 %v1589
        %v1591 = vand.u32 %v301, 4294901760
        %v1592 = vsub.f32 %v301, %v1591
        %v1593 = vand.u32 %v1592, 4294901760
        %v1594 = vsub.f32 %v1592, %v1593
        %v1595 = vand.u32 %v1594, 4294901760
        %1596 = vmatpush1.msra.mxu0 %v1595
        %v1597 = vand.u32 %v300, 4294901760
        %v1598 = vsub.f32 %v300, %v1597
        %v1599 = vand.u32 %v1598, 4294901760
        %v1600 = vsub.f32 %v1598, %v1599
        %v1601 = vand.u32 %v1600, 4294901760
        %1602 = vmatprep.subr.mxu0 %v1601
        %v1603 = vand.u32 %v299, 4294901760
        %v1604 = vsub.f32 %v299, %v1603
        %v1605 = vand.u32 %v1604, 4294901760
        %v1606 = vsub.f32 %v1604, %v1605
        %v1607 = vand.u32 %v1606, 4294901760
        %1608 = vmatpush1.msra.mxu0 %v1607
        %1609 = vmatprep.subr.mxu0 0.0
        %1610 = vmatpush2.msra.mxu0 0.0
        %1611 = vmatprep.subr.mxu0 0.0
        %1612 = vmatpush2.msra.mxu0 0.0
        %1613 = vmatprep.subr.mxu0 0.0
        %1614 = vmatpush2.msra.mxu0 0.0
        %1615 = vmatprep.subr.mxu0 0.0
        %1616 = vmatpush2.msra.mxu0 0.0
        %1617 = vmatprep.subr.mxu0 0.0
        %1618 = vmatpush2.msra.mxu0 0.0
        %1619 = vmatprep.subr.mxu0 0.0
        %1620 = vmatpush2.msra.mxu0 0.0
        %1621 = vmatprep.subr.mxu0 0.0
        %1622 = vmatpush2.msra.mxu0 0.0
        %1623 = vmatprep.subr.mxu0 0.0
        %1624 = vmatpush2.msra.mxu0 0.0
        %1625 = vmatprep.subr.mxu0 0.0
        %1626 = vmatpush2.msra.mxu0 0.0
        %1627 = vmatprep.subr.mxu0 0.0
        %1628 = vmatpush2.msra.mxu0 0.0
        %1629 = vmatprep.subr.mxu0 0.0
        %1630 = vmatpush2.msra.mxu0 0.0
        %1631 = vmatprep.subr.mxu0 0.0
        %1632 = vmatpush2.msra.mxu0 0.0
        %1633 = vmatprep.subr.mxu0 0.0
        %1634 = vmatpush2.msra.mxu0 0.0
        %1635 = vmatprep.subr.mxu0 0.0
        %1636 = vmatpush2.msra.mxu0 0.0
        %1637 = vmatprep.subr.mxu0 0.0
        %1638 = vmatpush2.msra.mxu0 0.0
        %1639 = vmatprep.subr.mxu0 0.0
        %1640 = vmatpush2.msra.mxu0 0.0
        %1641 = vmatprep.mubr.f32.mxu0 0.0
        %v1642 = vand.u32 %v1451, 4294901760
        %1643 = vmatmul.mubr.f32.gmra.mxu0 %v1642
        %v1644 = vpop.f32.mrf.mxu0
        %v1645 = vadd.f32 %v1533, %v1644
        %v1646 = vpop.f32.mrf.mxu0
        %v1647 = vadd.f32 %v1535, %v1646
        %1648 = vdwg.mxu0
        %1649 = vmatprep.subr.mxu0 0.0
        %1650 = vmatpush1.msra.mxu0 0.0
        %1651 = vmatprep.subr.mxu0 0.0
        %1652 = vmatpush1.msra.mxu0 0.0
        %1653 = vmatprep.subr.mxu0 0.0
        %1654 = vmatpush1.msra.mxu0 0.0
        %1655 = vmatprep.subr.mxu0 0.0
        %1656 = vmatpush1.msra.mxu0 0.0
        %1657 = vmatprep.subr.mxu0 0.0
        %1658 = vmatpush1.msra.mxu0 0.0
        %1659 = vmatprep.subr.mxu0 0.0
        %1660 = vmatpush1.msra.mxu0 0.0
        %1661 = vmatprep.subr.mxu0 0.0
        %1662 = vmatpush1.msra.mxu0 0.0
        %1663 = vmatprep.subr.mxu0 0.0
        %1664 = vmatpush1.msra.mxu0 0.0
        %1665 = vmatprep.subr.mxu0 0.0
        %1666 = vmatpush1.msra.mxu0 0.0
        %1667 = vmatprep.subr.mxu0 0.0
        %1668 = vmatpush1.msra.mxu0 0.0
        %1669 = vmatprep.subr.mxu0 0.0
        %1670 = vmatpush1.msra.mxu0 0.0
        %1671 = vmatprep.subr.mxu0 0.0
        %1672 = vmatpush1.msra.mxu0 0.0
        %v1673 = vand.u32 %v306, 4294901760
        %v1674 = vsub.f32 %v306, %v1673
        %1675 = vmatprep.subr.mxu0 %v1674
        %v1676 = vand.u32 %v305, 4294901760
        %v1677 = vsub.f32 %v305, %v1676
        %1678 = vmatpush1.msra.mxu0 %v1677
        %v1679 = vand.u32 %v304, 4294901760
        %v1680 = vsub.f32 %v304, %v1679
        %1681 = vmatprep.subr.mxu0 %v1680
        %v1682 = vand.u32 %v303, 4294901760
        %v1683 = vsub.f32 %v303, %v1682
        %1684 = vmatpush1.msra.mxu0 %v1683
        %v1685 = vand.u32 %v302, 4294901760
        %v1686 = vsub.f32 %v302, %v1685
        %1687 = vmatprep.subr.mxu0 %v1686
        %v1688 = vand.u32 %v301, 4294901760
        %v1689 = vsub.f32 %v301, %v1688
        %1690 = vmatpush1.msra.mxu0 %v1689
        %v1691 = vand.u32 %v300, 4294901760
        %v1692 = vsub.f32 %v300, %v1691
        %1693 = vmatprep.subr.mxu0 %v1692
        %v1694 = vand.u32 %v299, 4294901760
        %v1695 = vsub.f32 %v299, %v1694
        %1696 = vmatpush1.msra.mxu0 %v1695
        %1697 = vmatprep.subr.mxu0 0.0
        %1698 = vmatpush2.msra.mxu0 0.0
        %1699 = vmatprep.subr.mxu0 0.0
        %1700 = vmatpush2.msra.mxu0 0.0
        %1701 = vmatprep.subr.mxu0 0.0
        %1702 = vmatpush2.msra.mxu0 0.0
        %1703 = vmatprep.subr.mxu0 0.0
        %1704 = vmatpush2.msra.mxu0 0.0
        %1705 = vmatprep.subr.mxu0 0.0
        %1706 = vmatpush2.msra.mxu0 0.0
        %1707 = vmatprep.subr.mxu0 0.0
        %1708 = vmatpush2.msra.mxu0 0.0
        %1709 = vmatprep.subr.mxu0 0.0
        %1710 = vmatpush2.msra.mxu0 0.0
        %1711 = vmatprep.subr.mxu0 0.0
        %1712 = vmatpush2.msra.mxu0 0.0
        %1713 = vmatprep.subr.mxu0 0.0
        %1714 = vmatpush2.msra.mxu0 0.0
        %1715 = vmatprep.subr.mxu0 0.0
        %1716 = vmatpush2.msra.mxu0 0.0
        %1717 = vmatprep.subr.mxu0 0.0
        %1718 = vmatpush2.msra.mxu0 0.0
        %1719 = vmatprep.subr.mxu0 0.0
        %1720 = vmatpush2.msra.mxu0 0.0
        %1721 = vmatprep.subr.mxu0 0.0
        %1722 = vmatpush2.msra.mxu0 0.0
        %1723 = vmatprep.subr.mxu0 0.0
        %1724 = vmatpush2.msra.mxu0 0.0
        %1725 = vmatprep.subr.mxu0 0.0
        %1726 = vmatpush2.msra.mxu0 0.0
        %1727 = vmatprep.subr.mxu0 0.0
        %1728 = vmatpush2.msra.mxu0 0.0
        %1729 = vmatprep.mubr.f32.mxu0 0.0
        %v1730 = vand.u32 %v1451, 4294901760
        %v1731 = vsub.f32 %v1451, %v1730
        %1732 = vmatmul.mubr.f32.gmra.mxu0 %v1731
        %v1733 = vpop.f32.mrf.mxu0
        %v1734 = vadd.f32 %v1645, %v1733
        %v1735 = vpop.f32.mrf.mxu0
        %v1736 = vadd.f32 %v1647, %v1735
        %1737 = vdwg.mxu0
        %1738 = vmatprep.subr.mxu0 0.0
        %1739 = vmatpush1.msra.mxu0 0.0
        %1740 = vmatprep.subr.mxu0 0.0
        %1741 = vmatpush1.msra.mxu0 0.0
        %1742 = vmatprep.subr.mxu0 0.0
        %1743 = vmatpush1.msra.mxu0 0.0
        %1744 = vmatprep.subr.mxu0 0.0
        %1745 = vmatpush1.msra.mxu0 0.0
        %1746 = vmatprep.subr.mxu0 0.0
        %1747 = vmatpush1.msra.mxu0 0.0
        %1748 = vmatprep.subr.mxu0 0.0
        %1749 = vmatpush1.msra.mxu0 0.0
        %1750 = vmatprep.subr.mxu0 0.0
        %1751 = vmatpush1.msra.mxu0 0.0
        %1752 = vmatprep.subr.mxu0 0.0
        %1753 = vmatpush1.msra.mxu0 0.0
        %1754 = vmatprep.subr.mxu0 0.0
        %1755 = vmatpush1.msra.mxu0 0.0
        %1756 = vmatprep.subr.mxu0 0.0
        %1757 = vmatpush1.msra.mxu0 0.0
        %1758 = vmatprep.subr.mxu0 0.0
        %1759 = vmatpush1.msra.mxu0 0.0
        %1760 = vmatprep.subr.mxu0 0.0
        %1761 = vmatpush1.msra.mxu0 0.0
        %v1762 = vand.u32 %v306, 4294901760
        %1763 = vmatprep.subr.mxu0 %v1762
        %v1764 = vand.u32 %v305, 4294901760
        %1765 = vmatpush1.msra.mxu0 %v1764
        %v1766 = vand.u32 %v304, 4294901760
        %1767 = vmatprep.subr.mxu0 %v1766
        %v1768 = vand.u32 %v303, 4294901760
        %1769 = vmatpush1.msra.mxu0 %v1768
        %v1770 = vand.u32 %v302, 4294901760
        %1771 = vmatprep.subr.mxu0 %v1770
        %v1772 = vand.u32 %v301, 4294901760
        %1773 = vmatpush1.msra.mxu0 %v1772
        %v1774 = vand.u32 %v300, 4294901760
        %1775 = vmatprep.subr.mxu0 %v1774
        %v1776 = vand.u32 %v299, 4294901760
        %1777 = vmatpush1.msra.mxu0 %v1776
        %1778 = vmatprep.subr.mxu0 0.0
        %1779 = vmatpush2.msra.mxu0 0.0
        %1780 = vmatprep.subr.mxu0 0.0
        %1781 = vmatpush2.msra.mxu0 0.0
        %1782 = vmatprep.subr.mxu0 0.0
        %1783 = vmatpush2.msra.mxu0 0.0
        %1784 = vmatprep.subr.mxu0 0.0
        %1785 = vmatpush2.msra.mxu0 0.0
        %1786 = vmatprep.subr.mxu0 0.0
        %1787 = vmatpush2.msra.mxu0 0.0
        %1788 = vmatprep.subr.mxu0 0.0
        %1789 = vmatpush2.msra.mxu0 0.0
        %1790 = vmatprep.subr.mxu0 0.0
        %1791 = vmatpush2.msra.mxu0 0.0
        %1792 = vmatprep.subr.mxu0 0.0
        %1793 = vmatpush2.msra.mxu0 0.0
        %1794 = vmatprep.subr.mxu0 0.0
        %1795 = vmatpush2.msra.mxu0 0.0
        %1796 = vmatprep.subr.mxu0 0.0
        %1797 = vmatpush2.msra.mxu0 0.0
        %1798 = vmatprep.subr.mxu0 0.0
        %1799 = vmatpush2.msra.mxu0 0.0
        %1800 = vmatprep.subr.mxu0 0.0
        %1801 = vmatpush2.msra.mxu0 0.0
        %1802 = vmatprep.subr.mxu0 0.0
        %1803 = vmatpush2.msra.mxu0 0.0
        %1804 = vmatprep.subr.mxu0 0.0
        %1805 = vmatpush2.msra.mxu0 0.0
        %1806 = vmatprep.subr.mxu0 0.0
        %1807 = vmatpush2.msra.mxu0 0.0
        %1808 = vmatprep.subr.mxu0 0.0
        %1809 = vmatpush2.msra.mxu0 0.0
        %1810 = vmatprep.mubr.f32.mxu0 0.0
        %v1811 = vand.u32 %v1451, 4294901760
        %v1812 = vsub.f32 %v1451, %v1811
        %v1813 = vand.u32 %v1812, 4294901760
        %1814 = vmatmul.mubr.f32.gmra.mxu0 %v1813
        %v1815 = vpop.f32.mrf.mxu0
        %v1816 = vadd.f32 %v1734, %v1815
        %v1817 = vpop.f32.mrf.mxu0
        %v1818 = vadd.f32 %v1736, %v1817
        %1819 = vdwg.mxu0
        %1820 = vmatprep.subr.mxu0 0.0
        %1821 = vmatpush1.msra.mxu0 0.0
        %1822 = vmatprep.subr.mxu0 0.0
        %1823 = vmatpush1.msra.mxu0 0.0
        %1824 = vmatprep.subr.mxu0 0.0
        %1825 = vmatpush1.msra.mxu0 0.0
        %1826 = vmatprep.subr.mxu0 0.0
        %1827 = vmatpush1.msra.mxu0 0.0
        %1828 = vmatprep.subr.mxu0 0.0
        %1829 = vmatpush1.msra.mxu0 0.0
        %1830 = vmatprep.subr.mxu0 0.0
        %1831 = vmatpush1.msra.mxu0 0.0
        %1832 = vmatprep.subr.mxu0 0.0
        %1833 = vmatpush1.msra.mxu0 0.0
        %1834 = vmatprep.subr.mxu0 0.0
        %1835 = vmatpush1.msra.mxu0 0.0
        %1836 = vmatprep.subr.mxu0 0.0
        %1837 = vmatpush1.msra.mxu0 0.0
        %1838 = vmatprep.subr.mxu0 0.0
        %1839 = vmatpush1.msra.mxu0 0.0
        %1840 = vmatprep.subr.mxu0 0.0
        %1841 = vmatpush1.msra.mxu0 0.0
        %1842 = vmatprep.subr.mxu0 0.0
        %1843 = vmatpush1.msra.mxu0 0.0
        %v1844 = vand.u32 %v306, 4294901760
        %v1845 = vsub.f32 %v306, %v1844
        %v1846 = vand.u32 %v1845, 4294901760
        %1847 = vmatprep.subr.mxu0 %v1846
        %v1848 = vand.u32 %v305, 4294901760
        %v1849 = vsub.f32 %v305, %v1848
        %v1850 = vand.u32 %v1849, 4294901760
        %1851 = vmatpush1.msra.mxu0 %v1850
        %v1852 = vand.u32 %v304, 4294901760
        %v1853 = vsub.f32 %v304, %v1852
        %v1854 = vand.u32 %v1853, 4294901760
        %1855 = vmatprep.subr.mxu0 %v1854
        %v1856 = vand.u32 %v303, 4294901760
        %v1857 = vsub.f32 %v303, %v1856
        %v1858 = vand.u32 %v1857, 4294901760
        %1859 = vmatpush1.msra.mxu0 %v1858
        %v1860 = vand.u32 %v302, 4294901760
        %v1861 = vsub.f32 %v302, %v1860
        %v1862 = vand.u32 %v1861, 4294901760
        %1863 = vmatprep.subr.mxu0 %v1862
        %v1864 = vand.u32 %v301, 4294901760
        %v1865 = vsub.f32 %v301, %v1864
        %v1866 = vand.u32 %v1865, 4294901760
        %1867 = vmatpush1.msra.mxu0 %v1866
        %v1868 = vand.u32 %v300, 4294901760
        %v1869 = vsub.f32 %v300, %v1868
        %v1870 = vand.u32 %v1869, 4294901760
        %1871 = vmatprep.subr.mxu0 %v1870
        %v1872 = vand.u32 %v299, 4294901760
        %v1873 = vsub.f32 %v299, %v1872
        %v1874 = vand.u32 %v1873, 4294901760
        %1875 = vmatpush1.msra.mxu0 %v1874
        %1876 = vmatprep.subr.mxu0 0.0
        %1877 = vmatpush2.msra.mxu0 0.0
        %1878 = vmatprep.subr.mxu0 0.0
        %1879 = vmatpush2.msra.mxu0 0.0
        %1880 = vmatprep.subr.mxu0 0.0
        %1881 = vmatpush2.msra.mxu0 0.0
        %1882 = vmatprep.subr.mxu0 0.0
        %1883 = vmatpush2.msra.mxu0 0.0
        %1884 = vmatprep.subr.mxu0 0.0
        %1885 = vmatpush2.msra.mxu0 0.0
        %1886 = vmatprep.subr.mxu0 0.0
        %1887 = vmatpush2.msra.mxu0 0.0
        %1888 = vmatprep.subr.mxu0 0.0
        %1889 = vmatpush2.msra.mxu0 0.0
        %1890 = vmatprep.subr.mxu0 0.0
        %1891 = vmatpush2.msra.mxu0 0.0
        %1892 = vmatprep.subr.mxu0 0.0
        %1893 = vmatpush2.msra.mxu0 0.0
        %1894 = vmatprep.subr.mxu0 0.0
        %1895 = vmatpush2.msra.mxu0 0.0
        %1896 = vmatprep.subr.mxu0 0.0
        %1897 = vmatpush2.msra.mxu0 0.0
        %1898 = vmatprep.subr.mxu0 0.0
        %1899 = vmatpush2.msra.mxu0 0.0
        %1900 = vmatprep.subr.mxu0 0.0
        %1901 = vmatpush2.msra.mxu0 0.0
        %1902 = vmatprep.subr.mxu0 0.0
        %1903 = vmatpush2.msra.mxu0 0.0
        %1904 = vmatprep.subr.mxu0 0.0
        %1905 = vmatpush2.msra.mxu0 0.0
        %1906 = vmatprep.subr.mxu0 0.0
        %1907 = vmatpush2.msra.mxu0 0.0
        %1908 = vmatprep.mubr.f32.mxu0 0.0
        %v1909 = vand.u32 %v1451, 4294901760
        %1910 = vmatmul.mubr.f32.gmra.mxu0 %v1909
        %v1911 = vpop.f32.mrf.mxu0
        %v1912 = vadd.f32 %v1816, %v1911
        %v1913 = vpop.f32.mrf.mxu0
        %v1914 = vadd.f32 %v1818, %v1913
        %1915 = vdwg.mxu0
        %1916 = vmatprep.subr.mxu0 0.0
        %1917 = vmatpush1.msra.mxu0 0.0
        %1918 = vmatprep.subr.mxu0 0.0
        %1919 = vmatpush1.msra.mxu0 0.0
        %1920 = vmatprep.subr.mxu0 0.0
        %1921 = vmatpush1.msra.mxu0 0.0
        %1922 = vmatprep.subr.mxu0 0.0
        %1923 = vmatpush1.msra.mxu0 0.0
        %1924 = vmatprep.subr.mxu0 0.0
        %1925 = vmatpush1.msra.mxu0 0.0
        %1926 = vmatprep.subr.mxu0 0.0
        %1927 = vmatpush1.msra.mxu0 0.0
        %1928 = vmatprep.subr.mxu0 0.0
        %1929 = vmatpush1.msra.mxu0 0.0
        %1930 = vmatprep.subr.mxu0 0.0
        %1931 = vmatpush1.msra.mxu0 0.0
        %1932 = vmatprep.subr.mxu0 0.0
        %1933 = vmatpush1.msra.mxu0 0.0
        %1934 = vmatprep.subr.mxu0 0.0
        %1935 = vmatpush1.msra.mxu0 0.0
        %1936 = vmatprep.subr.mxu0 0.0
        %1937 = vmatpush1.msra.mxu0 0.0
        %1938 = vmatprep.subr.mxu0 0.0
        %1939 = vmatpush1.msra.mxu0 0.0
        %v1940 = vand.u32 %v306, 4294901760
        %1941 = vmatprep.subr.mxu0 %v1940
        %v1942 = vand.u32 %v305, 4294901760
        %1943 = vmatpush1.msra.mxu0 %v1942
        %v1944 = vand.u32 %v304, 4294901760
        %1945 = vmatprep.subr.mxu0 %v1944
        %v1946 = vand.u32 %v303, 4294901760
        %1947 = vmatpush1.msra.mxu0 %v1946
        %v1948 = vand.u32 %v302, 4294901760
        %1949 = vmatprep.subr.mxu0 %v1948
        %v1950 = vand.u32 %v301, 4294901760
        %1951 = vmatpush1.msra.mxu0 %v1950
        %v1952 = vand.u32 %v300, 4294901760
        %1953 = vmatprep.subr.mxu0 %v1952
        %v1954 = vand.u32 %v299, 4294901760
        %1955 = vmatpush1.msra.mxu0 %v1954
        %1956 = vmatprep.subr.mxu0 0.0
        %1957 = vmatpush2.msra.mxu0 0.0
        %1958 = vmatprep.subr.mxu0 0.0
        %1959 = vmatpush2.msra.mxu0 0.0
        %1960 = vmatprep.subr.mxu0 0.0
        %1961 = vmatpush2.msra.mxu0 0.0
        %1962 = vmatprep.subr.mxu0 0.0
        %1963 = vmatpush2.msra.mxu0 0.0
        %1964 = vmatprep.subr.mxu0 0.0
        %1965 = vmatpush2.msra.mxu0 0.0
        %1966 = vmatprep.subr.mxu0 0.0
        %1967 = vmatpush2.msra.mxu0 0.0
        %1968 = vmatprep.subr.mxu0 0.0
        %1969 = vmatpush2.msra.mxu0 0.0
        %1970 = vmatprep.subr.mxu0 0.0
        %1971 = vmatpush2.msra.mxu0 0.0
        %1972 = vmatprep.subr.mxu0 0.0
        %1973 = vmatpush2.msra.mxu0 0.0
        %1974 = vmatprep.subr.mxu0 0.0
        %1975 = vmatpush2.msra.mxu0 0.0
        %1976 = vmatprep.subr.mxu0 0.0
        %1977 = vmatpush2.msra.mxu0 0.0
        %1978 = vmatprep.subr.mxu0 0.0
        %1979 = vmatpush2.msra.mxu0 0.0
        %1980 = vmatprep.subr.mxu0 0.0
        %1981 = vmatpush2.msra.mxu0 0.0
        %1982 = vmatprep.subr.mxu0 0.0
        %1983 = vmatpush2.msra.mxu0 0.0
        %1984 = vmatprep.subr.mxu0 0.0
        %1985 = vmatpush2.msra.mxu0 0.0
        %1986 = vmatprep.subr.mxu0 0.0
        %1987 = vmatpush2.msra.mxu0 0.0
        %1988 = vmatprep.mubr.f32.mxu0 0.0
        %v1989 = vand.u32 %v1451, 4294901760
        %1990 = vmatmul.mubr.f32.gmra.mxu0 %v1989
        %v1991 = vpop.f32.mrf.mxu0
        %v1992 = vadd.f32 %v1912, %v1991
        %v1993 = vpop.f32.mrf.mxu0
        %v1994 = vadd.f32 %v1914, %v1993
        %1995 = vdwg.mxu0
        %v1996 = vsub.f32 0.0, %v1992
        %v1997 = vsub.f32 0.0, %v1994
        %v1998 = vmul.f32 %v1996, 1.442695
        %v1999 = vpow.pop %v1998
        %v2000 = vmul.f32 %v1997, 1.442695
        %v2001 = vpow.pop %v2000
        %v2002 = vadd.f32 %v1999, 1.0
        %v2003 = vadd.f32 %v2001, 1.0
        %v2004 = vrcp.pop %v2002
        %v2005 = vmul.f32 1.0, %v2004
        %v2006 = vrcp.pop %v2003
        %v2007 = vmul.f32 1.0, %v2006
        %2009 = vset.pattern.permute.xlu0 0
        %2010 = vperm.xlu0 %2009, %v1432
        %v2011 = vpop.permute.xlu0 %2010
        %2014 = vset.pattern.permute.xlu0 0
        %2015 = vperm.xlu0 %2014, %v1434
        %v2016 = vpop.permute.xlu0 %2015
        %2019 = vset.pattern.permute.xlu0 0
        %2020 = vperm.xlu0 %2019, %v1436
        %v2021 = vpop.permute.xlu0 %2020
        %2024 = vset.pattern.permute.xlu0 0
        %2025 = vperm.xlu0 %2024, %v1438
        %v2026 = vpop.permute.xlu0 %2025
        %v2028 = vlaneseq
        %v2029 = vshrl.u32 %v2028, 7
        %v2030 = vsub.s32 0, %v2029
        %v2031 = vrot.slane %v2005, %v2030
        %v2032 = vlaneseq
        %v2033 = vshrl.u32 %v2032, 7
        %v2034 = vsub.s32 0, %v2033
        %v2035 = vrot.slane %v2007, %v2034
        %v2036 = vadd.f32 %v2011, %v2031
        %v2037 = vadd.f32 %v2011, %v2035
        %v2038 = vadd.f32 %v2016, %v2031
        %v2039 = vadd.f32 %v2016, %v2035
        %v2040 = vadd.f32 %v2021, %v2031
        %v2041 = vadd.f32 %v2021, %v2035
        %v2042 = vadd.f32 %v2026, %v2031
        %v2043 = vadd.f32 %v2026, %v2035
        %v2044 = vmul.f32 %v299, %v2036
        %v2045 = vmul.f32 %v300, %v2037
        %v2046 = vmul.f32 %v301, %v2038
        %v2047 = vmul.f32 %v302, %v2039
        %v2048 = vmul.f32 %v303, %v2040
        %v2049 = vmul.f32 %v304, %v2041
        %v2050 = vmul.f32 %v305, %v2042
        %v2051 = vmul.f32 %v306, %v2043
        %2052 = vst [vmem:[%s298] sm:$0xff] %v2044
        %2053 = vst [vmem:[%s298 + $0x8] sm:$0xff] %v2045
        %2054 = vst [vmem:[%s298 + $0x10] sm:$0xff] %v2046
        %2055 = vst [vmem:[%s298 + $0x18] sm:$0xff] %v2047
        %2056 = vst [vmem:[%s298 + $0x20] sm:$0xff] %v2048
        %2057 = vst [vmem:[%s298 + $0x28] sm:$0xff] %v2049
        %2058 = vst [vmem:[%s298 + $0x30] sm:$0xff] %v2050
        %2059 = vst [vmem:[%s298 + $0x38] sm:$0xff] %v2051
        %s2060 = sand.u32 %s186, 1
        %s2061 = scalar_lea.sflag [#allocation5], %s2060
        %s2062 = sand.u32 %s186, 1
        %s2063 = smul.addr %s2062, 64
        %s2064 = scalar_lea.vmem [#allocation6], %s2063
        // Predicated region
        $region53: #{tpu_custom_call.1} parent=47 // pred_check
          %p2065 = pneg %p196
        $region54: #{tpu_custom_call.1} parent=47 // pred_check_branch
          %2067 = sbr.rel (%p2065) target = $region56
        $region55: #{tpu_custom_call.1} parent=47 // pred_region
          %s2069 = ssub.s32 1024, 1024
          %2070 = vsyncadd %s2061, %s2069
          %s2071 = smul.addr %s26, 8
          %s2072 = smul.addr %s2071, 128
          %s2073 = scalar_lea.hbm %s7, %s2072
          %s2074 = sshll.u32 %s2064, 4
          %s2075 = int_to_ptr.vmem [resolvable:$true] %s2074
          %2080 = dma.vmem_to_hbm [thread:$0]  %s2075, 1024, %s2073, %s2061, 256, 256, 16
        $region56: #{tpu_custom_call.1} parent=47 // pred_fallthru
          _
      $region48: #{tpu_custom_call.1} parent=5 // pred_fallthru
        _
      %p2081 = scmp.le.s32.totalorder 2, %s21
      // Predicated region
      $region57: #{tpu_custom_call.1} parent=5 // pred_check
        %p2082 = pneg %p2081
      $region58: #{tpu_custom_call.1} parent=5 // pred_check_branch
        %2084 = sbr.rel (%p2082) target = $region60
      $region59: #{tpu_custom_call.1} parent=5 // pred_region
        %s2085 = ssub.s32 %s21, 2
        // Predicated region
        $region61: #{tpu_custom_call.1} parent=59 // pred_check
          %p2086 = pneg %p202
        $region62: #{tpu_custom_call.1} parent=59 // pred_check_branch
          %2088 = sbr.rel (%p2086) target = $region64
        $region63: #{tpu_custom_call.1} parent=59 // pred_region
          %s2089 = sand.u32 %s187, 1
          %s2090 = scalar_lea.sflag [#allocation5], %s2089
          %s2091 = sand.u32 %s187, 1
          %s2092 = smul.addr %s2091, 64
          %s2093 = scalar_lea.vmem [#allocation6], %s2092
          %2094 = dma.done %s2090, 1024
        $region64: #{tpu_custom_call.1} parent=59 // pred_fallthru
          _
      $region60: #{tpu_custom_call.1} parent=5 // pred_fallthru
        _
    $region6: #{tpu_custom_call.1} parent=1 // loop_footer
      %s25 = sadd.s32 1, %s21
    $region7: #{tpu_custom_call.1} parent=1 // loop_footer_branch
      %20 = sbr.rel target = $region3
    $region8: #{tpu_custom_call.1} parent=1 // loop_exit
      _
    %2095 = vsyncpa [#allocation4], 1
    %s2096 = scalar_lea.sflag [#allocation4], 1
    %2097 = vsyncpa %s2096, 1
    %2098 = vsyncpa [#allocation5], 1
    %s2099 = scalar_lea.sflag [#allocation5], 1
    %2100 = vsyncpa %s2099, 1

</llo_original>
